<compile_context>
chip_gen: v7x
topology: tpu7x:2x2x1
jax: 0.10.0
libtpu: 0.0.40
codegen_flags: <defaults>
</compile_context>

<pallas_src>
import functools

import jax
import jax.numpy as jnp
from jax.experimental import pallas as pl
from jax.experimental.pallas import tpu as pltpu


# -----------------------------------------------------------------------------
# Pallas kernel (one grid step == one independent sequence / child)
# -----------------------------------------------------------------------------
def _child_lstm_kernel(x_ref, wih0_ref, wih_ref, whh_ref, b_ref, wlin_ref,
                       blin_ref, out_ref, *, n_layers, n_hidden, n_steps,
                       n_batch, input_size):
    H, T, B = n_hidden, n_steps, n_batch
    G = 4 * H

    # --- Hoisted constants ----------------------------------------------------
    # Gate order is i, f, g, o; only g uses tanh.  One sigmoid pass per step via
    # tanh(x) = 2*sigmoid(2x) - 1: pre-scale tanh lanes by 2 (VPU), sigmoid the
    # whole (B, 4H) tile (single EUP pass), then fix up 2a - 1 on tanh lanes.
    lane = jax.lax.broadcasted_iota(jnp.int32, (B, G), 1)
    use_tanh = (lane >= 2 * H) & (lane < 3 * H)
    gate_scale = jnp.where(use_tanh, 2.0, 1.0).astype(jnp.float32)   # (B, 4H)
    gate_shift = jnp.where(use_tanh, -1.0, 0.0).astype(jnp.float32)  # (B, 4H)

    # One-hot time columns used to assemble the (T, H) "last batch row per step"
    # matrix entirely in vregs (no single-row masked stores / strided gathers).
    t_ids = jax.lax.broadcasted_iota(jnp.int32, (T, 1), 0)           # (T, 1)
    onehot_t = [(t_ids == t).astype(jnp.float32) for t in range(T)]

    h_seq = None                                     # inter-layer hidden sequence
    last = jnp.zeros((T, H), jnp.float32)            # out[:, -1, :] accumulator

    for layer in range(n_layers):                    # static, small
        # Hoisted input projection + bias: one batched op per layer.
        if layer == 0:
            x = x_ref[...]                           # (T*B, I)
            if input_size == 1:
                # Outer product on the VPU; avoids a K-padded MXU pass where all
                # but one contraction row would be zero.
                gx = x * wih0_ref[...] + b_ref[0]    # (T*B, 4H)
            else:
                gx = jnp.dot(x, wih0_ref[...],
                             preferred_element_type=jnp.float32) + b_ref[0]
        else:
            gx = jnp.dot(h_seq, wih_ref[layer - 1],
                         preferred_element_type=jnp.float32) + b_ref[layer]

        whh = whh_ref[layer]                         # (H, 4H)
        is_last = layer == n_layers - 1

        # reset_hidden_state(): h0 = c0 = 0.
        h = jnp.zeros((B, H), jnp.float32)
        c = jnp.zeros((B, H), jnp.float32)
        h_list = []

        for t in range(T):                           # static unroll (T small)
            gates = gx[t * B:(t + 1) * B, :] + jnp.dot(
                h, whh, preferred_element_type=jnp.float32)      # (B, 4H)
            a = jax.nn.sigmoid(gates * gate_scale)   # single full-width EUP pass
            act = a * gate_scale + gate_shift        # tanh lanes: 2a - 1
            i_g = act[:, 0 * H:1 * H]
            f_g = act[:, 1 * H:2 * H]
            g_g = act[:, 2 * H:3 * H]
            o_g = act[:, 3 * H:4 * H]
            c = f_g * c + i_g * g_g
            h = o_g * jnp.tanh(c)
            if is_last:
                # Only the last batch row feeds the head: out[:, -1, :].
                last = last + onehot_t[t] * h[B - 1:B, :]
            else:
                h_list.append(h)                     # next layer's input

        if not is_last:
            h_seq = jnp.concatenate(h_list, axis=0)  # (T*B, H), tile-aligned concat

    # Linear head on a lane-padded (H, O_pad) weight: lane-dense, unmasked store.
    out_ref[...] = (jnp.dot(last, wlin_ref[...],
                            preferred_element_type=jnp.float32)
                    + blin_ref[...])


# -----------------------------------------------------------------------------
# Wrappers: parameter packing + pallas_call
# -----------------------------------------------------------------------------
def child_network_forward_batched(x, params, *, n_layers, n_hidden, output_size):
    """x: (N, T, B, input_size) float32. Returns (N, T, output_size).

    N independent sequences are evaluated by one gridded pallas_call with the
    leading axis marked "parallel" (megacore / 2nd TensorCore on v7x).
    """
    N, T, B, I = x.shape
    H = n_hidden
    G = 4 * H
    O_pad = ((max(output_size, 1) + 127) // 128) * 128   # lane-dense output store

    x_flat = x.astype(jnp.float32).reshape(N, T * B, I)

    # Layer-0 input weight at native width (no K padding needed anymore).
    wih0 = params["weight_ih_l0"].T.astype(jnp.float32)              # (I, 4H)

    # Layers >= 1 input weights; dummy (never read) if single layer.
    if n_layers > 1:
        wih_rest = jnp.stack(
            [params[f"weight_ih_l{l}"].T for l in range(1, n_layers)]
        ).astype(jnp.float32)                                        # (L-1, H, 4H)
    else:
        wih_rest = jnp.zeros((1, H, G), jnp.float32)

    whh_stack = jnp.stack(
        [params[f"weight_hh_l{l}"].T for l in range(n_layers)]
    ).astype(jnp.float32)                                            # (L, H, 4H)
    b_stack = jnp.stack(
        [(params[f"bias_ih_l{l}"] + params[f"bias_hh_l{l}"]).reshape(1, G)
         for l in range(n_layers)]
    ).astype(jnp.float32)                                            # (L, 1, 4H)

    wlin = params["linear_weight"].T.astype(jnp.float32)             # (H, O)
    wlin_pad = jnp.pad(wlin, ((0, 0), (0, O_pad - output_size)))     # (H, O_pad)
    blin_pad = jnp.pad(
        params["linear_bias"].reshape(1, output_size).astype(jnp.float32),
        ((0, 0), (0, O_pad - output_size)))                          # (1, O_pad)

    kernel = functools.partial(_child_lstm_kernel, n_layers=n_layers,
                               n_hidden=H, n_steps=T, n_batch=B, input_size=I)

    def _full_spec(arr):
        nd = arr.ndim
        return pl.BlockSpec(arr.shape, lambda n, _nd=nd: (0,) * _nd)

    out_pad = pl.pallas_call(
        kernel,
        out_shape=jax.ShapeDtypeStruct((N, T, O_pad), jnp.float32),
        grid=(N,),
        in_specs=[
            pl.BlockSpec((None, T * B, I), lambda n: (n, 0, 0)),     # per-child x
            _full_spec(wih0),
            _full_spec(wih_rest),
            _full_spec(whh_stack),
            _full_spec(b_stack),
            _full_spec(wlin_pad),
            _full_spec(blin_pad),
        ],
        out_specs=pl.BlockSpec((None, T, O_pad), lambda n: (n, 0, 0)),
        compiler_params=pltpu.CompilerParams(
            dimension_semantics=("parallel",)),
    )(x_flat, wih0, wih_rest, whh_stack, b_stack, wlin_pad, blin_pad)

    return out_pad[:, :, :output_size]


def child_network_forward(x, params, *, n_layers, n_hidden, output_size):
    """x: (T, B, input_size) float32. Returns (T, output_size)."""
    out = child_network_forward_batched(x[None], params, n_layers=n_layers,
                                        n_hidden=n_hidden,
                                        output_size=output_size)
    return out[0]


# -----------------------------------------------------------------------------
# Pure-JAX reference (mirrors torch.nn.LSTM eval-mode forward) for verification
# -----------------------------------------------------------------------------
def child_network_ref(x, params, *, n_layers, n_hidden, output_size):
    T, B, _ = x.shape
    H = n_hidden
    inp = x.astype(jnp.float32)
    for l in range(n_layers):
        w_ih = params[f"weight_ih_l{l}"]
        w_hh = params[f"weight_hh_l{l}"]
        b = params[f"bias_ih_l{l}"] + params[f"bias_hh_l{l}"]
        h_t = jnp.zeros((B, H), jnp.float32)
        c_t = jnp.zeros((B, H), jnp.float32)
        outs = []
        for t in range(T):
            g = inp[t] @ w_ih.T + h_t @ w_hh.T + b
            i_g = jax.nn.sigmoid(g[:, 0 * H:1 * H])
            f_g = jax.nn.sigmoid(g[:, 1 * H:2 * H])
            g_g = jnp.tanh(g[:, 2 * H:3 * H])
            o_g = jax.nn.sigmoid(g[:, 3 * H:4 * H])
            c_t = f_g * c_t + i_g * g_g
            h_t = o_g * jnp.tanh(c_t)
            outs.append(h_t)
        inp = jnp.stack(outs)                          # (T, B, H)
    last = inp[:, -1, :]                               # out[:, -1, :]
    return last @ params["linear_weight"].T + params["linear_bias"]


# -----------------------------------------------------------------------------
# Deterministic parameter init (PyTorch-style uniform(-1/sqrt(H), 1/sqrt(H)))
# -----------------------------------------------------------------------------
def make_params(key, *, n_hidden, n_layers, input_size, output_size):
    H = n_hidden
    bound = 1.0 / float(H) ** 0.5
    params = {}
    k = key
    for l in range(n_layers):
        in_f = input_size if l == 0 else H
        k, k1, k2, k3, k4 = jax.random.split(k, 5)
        params[f"weight_ih_l{l}"] = jax.random.uniform(k1, (4 * H, in_f), jnp.float32, -bound, bound)
        params[f"weight_hh_l{l}"] = jax.random.uniform(k2, (4 * H, H), jnp.float32, -bound, bound)
        params[f"bias_ih_l{l}"] = jax.random.uniform(k3, (4 * H,), jnp.float32, -bound, bound)
        params[f"bias_hh_l{l}"] = jax.random.uniform(k4, (4 * H,), jnp.float32, -bound, bound)
    k, k1, k2 = jax.random.split(k, 3)
    params["linear_weight"] = jax.random.uniform(k1, (output_size, H), jnp.float32, -bound, bound)
    params["linear_bias"] = jax.random.uniform(k2, (output_size,), jnp.float32, -bound, bound)
    return params


if __name__ == "__main__":
    n_hidden = 32
    n_layers = 2
    input_size = 1
    output_size = 1
    seq_len = 8       # LSTM "batch" dim (size of self.hidden), per reset_hidden_state
    n_steps = 8       # time dimension of the input sequence
    n_children = 2    # independent sequences batched over the parallel grid axis

    key = jax.random.PRNGKey(0)
    key, pk, xk = jax.random.split(key, 3)
    params = make_params(pk, n_hidden=n_hidden, n_layers=n_layers,
                         input_size=input_size, output_size=output_size)
    xb = jax.random.normal(xk, (n_children, n_steps, seq_len, input_size),
                           jnp.float32)

    # Batched path: one gridded pallas_call over N independent sequences.
    outb = child_network_forward_batched(xb, params, n_layers=n_layers,
                                         n_hidden=n_hidden,
                                         output_size=output_size)
    outb = jax.block_until_ready(outb)
    assert outb.shape == (n_children, n_steps, output_size), outb.shape
    for i in range(n_children):
        ref = child_network_ref(xb[i], params, n_layers=n_layers,
                                n_hidden=n_hidden, output_size=output_size)
        assert jnp.allclose(outb[i], ref, atol=1e-5, rtol=1e-5), (i, outb[i], ref)

    # Single-sequence path (matches ChildNetwork.forward exactly).
    out1 = child_network_forward(xb[0], params, n_layers=n_layers,
                                 n_hidden=n_hidden, output_size=output_size)
    out1 = jax.block_until_ready(out1)
    assert out1.shape == (n_steps, output_size), out1.shape
    assert jnp.allclose(out1, outb[0], atol=1e-6, rtol=1e-6), (out1, outb[0])

    print("KERNEL_OK")
</pallas_src>

<mosaic_0001>
module attributes {stable_mosaic.version = 11 : i64} {
  func.func @_child_lstm_kernel(%arg0: i32, %arg1: memref<1x64x1xf32, #tpu.memory_space<vmem>>, %arg2: memref<1x128xf32, #tpu.memory_space<vmem>>, %arg3: memref<1x32x128xf32, #tpu.memory_space<vmem>>, %arg4: memref<2x32x128xf32, #tpu.memory_space<vmem>>, %arg5: memref<2x1x128xf32, #tpu.memory_space<vmem>>, %arg6: memref<32x128xf32, #tpu.memory_space<vmem>>, %arg7: memref<1x128xf32, #tpu.memory_space<vmem>>, %arg8: memref<1x8x128xf32, #tpu.memory_space<vmem>>) attributes {dimension_semantics = [#tpu.dimension_semantics<parallel>], iteration_bounds = array<i64: 2>, scalar_prefetch = 0 : i64, scratch_operands = 0 : i64, tpu.core_type = #tpu.core_type<tc>, window_params = [{transform_indices = @transform_0, window_bounds = array<i64: 1, 64, 1>}, {pipeline_mode = #tpu.pipeline_mode<synchronous>, transform_indices = @transform_1, window_bounds = array<i64: 1, 128>}, {pipeline_mode = #tpu.pipeline_mode<synchronous>, transform_indices = @transform_2, window_bounds = array<i64: 1, 32, 128>}, {pipeline_mode = #tpu.pipeline_mode<synchronous>, transform_indices = @transform_3, window_bounds = array<i64: 2, 32, 128>}, {pipeline_mode = #tpu.pipeline_mode<synchronous>, transform_indices = @transform_4, window_bounds = array<i64: 2, 1, 128>}, {pipeline_mode = #tpu.pipeline_mode<synchronous>, transform_indices = @transform_5, window_bounds = array<i64: 32, 128>}, {pipeline_mode = #tpu.pipeline_mode<synchronous>, transform_indices = @transform_6, window_bounds = array<i64: 1, 128>}, {transform_indices = @transform_7, window_bounds = array<i64: 1, 8, 128>}]} {
    %0 = tpu.iota {dimensions = array<i32: 1>} : vector<8x128xi32>
    %c64_i32 = arith.constant 64 : i32
    %1 = vector.broadcast %c64_i32 : i32 to vector<8x128xi32>
    %2 = arith.cmpi sge, %0, %1 : vector<8x128xi32>
    %c96_i32 = arith.constant 96 : i32
    %3 = vector.broadcast %c96_i32 : i32 to vector<8x128xi32>
    %4 = arith.cmpi slt, %0, %3 : vector<8x128xi32>
    %5 = arith.andi %2, %4 : vector<8x128xi1>
    %cst = arith.constant 2.000000e+00 : f32
    %cst_0 = arith.constant 1.000000e+00 : f32
    %6 = vector.broadcast %cst : f32 to vector<8x128xf32>
    %7 = vector.broadcast %cst_0 : f32 to vector<8x128xf32>
    %8 = arith.select %5, %6, %7 : vector<8x128xi1>, vector<8x128xf32>
    %cst_1 = arith.constant -1.000000e+00 : f32
    %cst_2 = arith.constant 0.000000e+00 : f32
    %9 = vector.broadcast %cst_1 : f32 to vector<8x128xf32>
    %10 = vector.broadcast %cst_2 : f32 to vector<8x128xf32>
    %11 = arith.select %5, %9, %10 : vector<8x128xi1>, vector<8x128xf32>
    %12 = tpu.iota {dimensions = array<i32: 0>} : vector<8x1xi32>
    %c0_i32 = arith.constant 0 : i32
    %13 = vector.broadcast %c0_i32 : i32 to vector<8x1xi32>
    %14 = arith.cmpi eq, %12, %13 : vector<8x1xi32>
    %15 = arith.extui %14 : vector<8x1xi1> to vector<8x1xi32>
    %16 = arith.sitofp %15 : vector<8x1xi32> to vector<8x1xf32>
    %c1_i32 = arith.constant 1 : i32
    %17 = vector.broadcast %c1_i32 : i32 to vector<8x1xi32>
    %18 = arith.cmpi eq, %12, %17 : vector<8x1xi32>
    %19 = arith.extui %18 : vector<8x1xi1> to vector<8x1xi32>
    %20 = arith.sitofp %19 : vector<8x1xi32> to vector<8x1xf32>
    %c2_i32 = arith.constant 2 : i32
    %21 = vector.broadcast %c2_i32 : i32 to vector<8x1xi32>
    %22 = arith.cmpi eq, %12, %21 : vector<8x1xi32>
    %23 = arith.extui %22 : vector<8x1xi1> to vector<8x1xi32>
    %24 = arith.sitofp %23 : vector<8x1xi32> to vector<8x1xf32>
    %c3_i32 = arith.constant 3 : i32
    %25 = vector.broadcast %c3_i32 : i32 to vector<8x1xi32>
    %26 = arith.cmpi eq, %12, %25 : vector<8x1xi32>
    %27 = arith.extui %26 : vector<8x1xi1> to vector<8x1xi32>
    %28 = arith.sitofp %27 : vector<8x1xi32> to vector<8x1xf32>
    %c4_i32 = arith.constant 4 : i32
    %29 = vector.broadcast %c4_i32 : i32 to vector<8x1xi32>
    %30 = arith.cmpi eq, %12, %29 : vector<8x1xi32>
    %31 = arith.extui %30 : vector<8x1xi1> to vector<8x1xi32>
    %32 = arith.sitofp %31 : vector<8x1xi32> to vector<8x1xf32>
    %c5_i32 = arith.constant 5 : i32
    %33 = vector.broadcast %c5_i32 : i32 to vector<8x1xi32>
    %34 = arith.cmpi eq, %12, %33 : vector<8x1xi32>
    %35 = arith.extui %34 : vector<8x1xi1> to vector<8x1xi32>
    %36 = arith.sitofp %35 : vector<8x1xi32> to vector<8x1xf32>
    %c6_i32 = arith.constant 6 : i32
    %37 = vector.broadcast %c6_i32 : i32 to vector<8x1xi32>
    %38 = arith.cmpi eq, %12, %37 : vector<8x1xi32>
    %39 = arith.extui %38 : vector<8x1xi1> to vector<8x1xi32>
    %40 = arith.sitofp %39 : vector<8x1xi32> to vector<8x1xf32>
    %c7_i32 = arith.constant 7 : i32
    %41 = vector.broadcast %c7_i32 : i32 to vector<8x1xi32>
    %42 = arith.cmpi eq, %12, %41 : vector<8x1xi32>
    %43 = arith.extui %42 : vector<8x1xi1> to vector<8x1xi32>
    %44 = arith.sitofp %43 : vector<8x1xi32> to vector<8x1xf32>
    %cst_3 = arith.constant 0.000000e+00 : f32
    %45 = vector.broadcast %cst_3 : f32 to vector<8x32xf32>
    %c0 = arith.constant 0 : index
    %c0_4 = arith.constant 0 : index
    %c0_5 = arith.constant 0 : index
    %46 = vector.load %arg1[%c0, %c0_4, %c0_5] : memref<1x64x1xf32, #tpu.memory_space<vmem>>, vector<1x64x1xf32>
    %47 = vector.shape_cast %46 : vector<1x64x1xf32> to vector<64x1xf32>
    %c0_6 = arith.constant 0 : index
    %c0_7 = arith.constant 0 : index
    %48 = vector.load %arg2[%c0_6, %c0_7] : memref<1x128xf32, #tpu.memory_space<vmem>>, vector<1x128xf32>
    %49 = vector.broadcast %47 : vector<64x1xf32> to vector<64x128xf32>
    %50 = vector.broadcast %48 : vector<1x128xf32> to vector<64x128xf32>
    %51 = arith.mulf %49, %50 : vector<64x128xf32>
    %c0_8 = arith.constant 0 : index
    %c0_9 = arith.constant 0 : index
    %c0_10 = arith.constant 0 : index
    %52 = vector.load %arg5[%c0_8, %c0_9, %c0_10] : memref<2x1x128xf32, #tpu.memory_space<vmem>>, vector<1x1x128xf32>
    %53 = vector.shape_cast %52 : vector<1x1x128xf32> to vector<1x128xf32>
    %54 = vector.broadcast %53 : vector<1x128xf32> to vector<64x128xf32>
    %55 = arith.addf %51, %54 : vector<64x128xf32>
    %c0_11 = arith.constant 0 : index
    %c0_12 = arith.constant 0 : index
    %c0_13 = arith.constant 0 : index
    %56 = vector.load %arg4[%c0_11, %c0_12, %c0_13] : memref<2x32x128xf32, #tpu.memory_space<vmem>>, vector<1x32x128xf32>
    %57 = vector.shape_cast %56 : vector<1x32x128xf32> to vector<32x128xf32>
    %cst_14 = arith.constant 0.000000e+00 : f32
    %58 = vector.broadcast %cst_14 : f32 to vector<8x32xf32>
    %cst_15 = arith.constant 0.000000e+00 : f32
    %59 = vector.broadcast %cst_15 : f32 to vector<8x32xf32>
    %60 = vector.extract_strided_slice %55 {offsets = [0, 0], sizes = [8, 128], strides = [1, 1]} : vector<64x128xf32> to vector<8x128xf32>
    %cst_16 = arith.constant dense<0.000000e+00> : vector<8x128xf32>
    %61 = tpu.matmul %58, %57, %cst_16 {dimension_numbers = #tpu.dot_dimension_numbers<[1], [0], [0], [1], [0, 0, 1, 1], [], []>} : vector<8x32xf32>, vector<32x128xf32>, vector<8x128xf32> -> vector<8x128xf32>
    %62 = arith.addf %60, %61 : vector<8x128xf32>
    %63 = arith.mulf %62, %8 : vector<8x128xf32>
    %64 = arith.negf %63 : vector<8x128xf32>
    %65 = math.exp %64 : vector<8x128xf32>
    %cst_17 = arith.constant 1.000000e+00 : f32
    %66 = vector.broadcast %cst_17 : f32 to vector<8x128xf32>
    %67 = arith.addf %66, %65 : vector<8x128xf32>
    %68 = arith.divf %66, %67 : vector<8x128xf32>
    %69 = arith.mulf %68, %8 : vector<8x128xf32>
    %70 = arith.addf %69, %11 : vector<8x128xf32>
    %71 = vector.extract_strided_slice %70 {offsets = [0, 0], sizes = [8, 32], strides = [1, 1]} : vector<8x128xf32> to vector<8x32xf32>
    %72 = vector.extract_strided_slice %70 {offsets = [0, 32], sizes = [8, 32], strides = [1, 1]} : vector<8x128xf32> to vector<8x32xf32>
    %73 = vector.extract_strided_slice %70 {offsets = [0, 64], sizes = [8, 32], strides = [1, 1]} : vector<8x128xf32> to vector<8x32xf32>
    %74 = vector.extract_strided_slice %70 {offsets = [0, 96], sizes = [8, 32], strides = [1, 1]} : vector<8x128xf32> to vector<8x32xf32>
    %75 = arith.mulf %72, %59 : vector<8x32xf32>
    %76 = arith.mulf %71, %73 : vector<8x32xf32>
    %77 = arith.addf %75, %76 : vector<8x32xf32>
    %78 = math.tanh %77 : vector<8x32xf32>
    %79 = arith.mulf %74, %78 : vector<8x32xf32>
    %80 = vector.extract_strided_slice %55 {offsets = [8, 0], sizes = [8, 128], strides = [1, 1]} : vector<64x128xf32> to vector<8x128xf32>
    %cst_18 = arith.constant dense<0.000000e+00> : vector<8x128xf32>
    %81 = tpu.matmul %79, %57, %cst_18 {dimension_numbers = #tpu.dot_dimension_numbers<[1], [0], [0], [1], [0, 0, 1, 1], [], []>} : vector<8x32xf32>, vector<32x128xf32>, vector<8x128xf32> -> vector<8x128xf32>
    %82 = arith.addf %80, %81 : vector<8x128xf32>
    %83 = arith.mulf %82, %8 : vector<8x128xf32>
    %84 = arith.negf %83 : vector<8x128xf32>
    %85 = math.exp %84 : vector<8x128xf32>
    %cst_19 = arith.constant 1.000000e+00 : f32
    %86 = vector.broadcast %cst_19 : f32 to vector<8x128xf32>
    %87 = arith.addf %86, %85 : vector<8x128xf32>
    %88 = arith.divf %86, %87 : vector<8x128xf32>
    %89 = arith.mulf %88, %8 : vector<8x128xf32>
    %90 = arith.addf %89, %11 : vector<8x128xf32>
    %91 = vector.extract_strided_slice %90 {offsets = [0, 0], sizes = [8, 32], strides = [1, 1]} : vector<8x128xf32> to vector<8x32xf32>
    %92 = vector.extract_strided_slice %90 {offsets = [0, 32], sizes = [8, 32], strides = [1, 1]} : vector<8x128xf32> to vector<8x32xf32>
    %93 = vector.extract_strided_slice %90 {offsets = [0, 64], sizes = [8, 32], strides = [1, 1]} : vector<8x128xf32> to vector<8x32xf32>
    %94 = vector.extract_strided_slice %90 {offsets = [0, 96], sizes = [8, 32], strides = [1, 1]} : vector<8x128xf32> to vector<8x32xf32>
    %95 = arith.mulf %92, %77 : vector<8x32xf32>
    %96 = arith.mulf %91, %93 : vector<8x32xf32>
    %97 = arith.addf %95, %96 : vector<8x32xf32>
    %98 = math.tanh %97 : vector<8x32xf32>
    %99 = arith.mulf %94, %98 : vector<8x32xf32>
    %100 = vector.extract_strided_slice %55 {offsets = [16, 0], sizes = [8, 128], strides = [1, 1]} : vector<64x128xf32> to vector<8x128xf32>
    %cst_20 = arith.constant dense<0.000000e+00> : vector<8x128xf32>
    %101 = tpu.matmul %99, %57, %cst_20 {dimension_numbers = #tpu.dot_dimension_numbers<[1], [0], [0], [1], [0, 0, 1, 1], [], []>} : vector<8x32xf32>, vector<32x128xf32>, vector<8x128xf32> -> vector<8x128xf32>
    %102 = arith.addf %100, %101 : vector<8x128xf32>
    %103 = arith.mulf %102, %8 : vector<8x128xf32>
    %104 = arith.negf %103 : vector<8x128xf32>
    %105 = math.exp %104 : vector<8x128xf32>
    %cst_21 = arith.constant 1.000000e+00 : f32
    %106 = vector.broadcast %cst_21 : f32 to vector<8x128xf32>
    %107 = arith.addf %106, %105 : vector<8x128xf32>
    %108 = arith.divf %106, %107 : vector<8x128xf32>
    %109 = arith.mulf %108, %8 : vector<8x128xf32>
    %110 = arith.addf %109, %11 : vector<8x128xf32>
    %111 = vector.extract_strided_slice %110 {offsets = [0, 0], sizes = [8, 32], strides = [1, 1]} : vector<8x128xf32> to vector<8x32xf32>
    %112 = vector.extract_strided_slice %110 {offsets = [0, 32], sizes = [8, 32], strides = [1, 1]} : vector<8x128xf32> to vector<8x32xf32>
    %113 = vector.extract_strided_slice %110 {offsets = [0, 64], sizes = [8, 32], strides = [1, 1]} : vector<8x128xf32> to vector<8x32xf32>
    %114 = vector.extract_strided_slice %110 {offsets = [0, 96], sizes = [8, 32], strides = [1, 1]} : vector<8x128xf32> to vector<8x32xf32>
    %115 = arith.mulf %112, %97 : vector<8x32xf32>
    %116 = arith.mulf %111, %113 : vector<8x32xf32>
    %117 = arith.addf %115, %116 : vector<8x32xf32>
    %118 = math.tanh %117 : vector<8x32xf32>
    %119 = arith.mulf %114, %118 : vector<8x32xf32>
    %120 = vector.extract_strided_slice %55 {offsets = [24, 0], sizes = [8, 128], strides = [1, 1]} : vector<64x128xf32> to vector<8x128xf32>
    %cst_22 = arith.constant dense<0.000000e+00> : vector<8x128xf32>
    %121 = tpu.matmul %119, %57, %cst_22 {dimension_numbers = #tpu.dot_dimension_numbers<[1], [0], [0], [1], [0, 0, 1, 1], [], []>} : vector<8x32xf32>, vector<32x128xf32>, vector<8x128xf32> -> vector<8x128xf32>
    %122 = arith.addf %120, %121 : vector<8x128xf32>
    %123 = arith.mulf %122, %8 : vector<8x128xf32>
    %124 = arith.negf %123 : vector<8x128xf32>
    %125 = math.exp %124 : vector<8x128xf32>
    %cst_23 = arith.constant 1.000000e+00 : f32
    %126 = vector.broadcast %cst_23 : f32 to vector<8x128xf32>
    %127 = arith.addf %126, %125 : vector<8x128xf32>
    %128 = arith.divf %126, %127 : vector<8x128xf32>
    %129 = arith.mulf %128, %8 : vector<8x128xf32>
    %130 = arith.addf %129, %11 : vector<8x128xf32>
    %131 = vector.extract_strided_slice %130 {offsets = [0, 0], sizes = [8, 32], strides = [1, 1]} : vector<8x128xf32> to vector<8x32xf32>
    %132 = vector.extract_strided_slice %130 {offsets = [0, 32], sizes = [8, 32], strides = [1, 1]} : vector<8x128xf32> to vector<8x32xf32>
    %133 = vector.extract_strided_slice %130 {offsets = [0, 64], sizes = [8, 32], strides = [1, 1]} : vector<8x128xf32> to vector<8x32xf32>
    %134 = vector.extract_strided_slice %130 {offsets = [0, 96], sizes = [8, 32], strides = [1, 1]} : vector<8x128xf32> to vector<8x32xf32>
    %135 = arith.mulf %132, %117 : vector<8x32xf32>
    %136 = arith.mulf %131, %133 : vector<8x32xf32>
    %137 = arith.addf %135, %136 : vector<8x32xf32>
    %138 = math.tanh %137 : vector<8x32xf32>
    %139 = arith.mulf %134, %138 : vector<8x32xf32>
    %140 = vector.extract_strided_slice %55 {offsets = [32, 0], sizes = [8, 128], strides = [1, 1]} : vector<64x128xf32> to vector<8x128xf32>
    %cst_24 = arith.constant dense<0.000000e+00> : vector<8x128xf32>
    %141 = tpu.matmul %139, %57, %cst_24 {dimension_numbers = #tpu.dot_dimension_numbers<[1], [0], [0], [1], [0, 0, 1, 1], [], []>} : vector<8x32xf32>, vector<32x128xf32>, vector<8x128xf32> -> vector<8x128xf32>
    %142 = arith.addf %140, %141 : vector<8x128xf32>
    %143 = arith.mulf %142, %8 : vector<8x128xf32>
    %144 = arith.negf %143 : vector<8x128xf32>
    %145 = math.exp %144 : vector<8x128xf32>
    %cst_25 = arith.constant 1.000000e+00 : f32
    %146 = vector.broadcast %cst_25 : f32 to vector<8x128xf32>
    %147 = arith.addf %146, %145 : vector<8x128xf32>
    %148 = arith.divf %146, %147 : vector<8x128xf32>
    %149 = arith.mulf %148, %8 : vector<8x128xf32>
    %150 = arith.addf %149, %11 : vector<8x128xf32>
    %151 = vector.extract_strided_slice %150 {offsets = [0, 0], sizes = [8, 32], strides = [1, 1]} : vector<8x128xf32> to vector<8x32xf32>
    %152 = vector.extract_strided_slice %150 {offsets = [0, 32], sizes = [8, 32], strides = [1, 1]} : vector<8x128xf32> to vector<8x32xf32>
    %153 = vector.extract_strided_slice %150 {offsets = [0, 64], sizes = [8, 32], strides = [1, 1]} : vector<8x128xf32> to vector<8x32xf32>
    %154 = vector.extract_strided_slice %150 {offsets = [0, 96], sizes = [8, 32], strides = [1, 1]} : vector<8x128xf32> to vector<8x32xf32>
    %155 = arith.mulf %152, %137 : vector<8x32xf32>
    %156 = arith.mulf %151, %153 : vector<8x32xf32>
    %157 = arith.addf %155, %156 : vector<8x32xf32>
    %158 = math.tanh %157 : vector<8x32xf32>
    %159 = arith.mulf %154, %158 : vector<8x32xf32>
    %160 = vector.extract_strided_slice %55 {offsets = [40, 0], sizes = [8, 128], strides = [1, 1]} : vector<64x128xf32> to vector<8x128xf32>
    %cst_26 = arith.constant dense<0.000000e+00> : vector<8x128xf32>
    %161 = tpu.matmul %159, %57, %cst_26 {dimension_numbers = #tpu.dot_dimension_numbers<[1], [0], [0], [1], [0, 0, 1, 1], [], []>} : vector<8x32xf32>, vector<32x128xf32>, vector<8x128xf32> -> vector<8x128xf32>
    %162 = arith.addf %160, %161 : vector<8x128xf32>
    %163 = arith.mulf %162, %8 : vector<8x128xf32>
    %164 = arith.negf %163 : vector<8x128xf32>
    %165 = math.exp %164 : vector<8x128xf32>
    %cst_27 = arith.constant 1.000000e+00 : f32
    %166 = vector.broadcast %cst_27 : f32 to vector<8x128xf32>
    %167 = arith.addf %166, %165 : vector<8x128xf32>
    %168 = arith.divf %166, %167 : vector<8x128xf32>
    %169 = arith.mulf %168, %8 : vector<8x128xf32>
    %170 = arith.addf %169, %11 : vector<8x128xf32>
    %171 = vector.extract_strided_slice %170 {offsets = [0, 0], sizes = [8, 32], strides = [1, 1]} : vector<8x128xf32> to vector<8x32xf32>
    %172 = vector.extract_strided_slice %170 {offsets = [0, 32], sizes = [8, 32], strides = [1, 1]} : vector<8x128xf32> to vector<8x32xf32>
    %173 = vector.extract_strided_slice %170 {offsets = [0, 64], sizes = [8, 32], strides = [1, 1]} : vector<8x128xf32> to vector<8x32xf32>
    %174 = vector.extract_strided_slice %170 {offsets = [0, 96], sizes = [8, 32], strides = [1, 1]} : vector<8x128xf32> to vector<8x32xf32>
    %175 = arith.mulf %172, %157 : vector<8x32xf32>
    %176 = arith.mulf %171, %173 : vector<8x32xf32>
    %177 = arith.addf %175, %176 : vector<8x32xf32>
    %178 = math.tanh %177 : vector<8x32xf32>
    %179 = arith.mulf %174, %178 : vector<8x32xf32>
    %180 = vector.extract_strided_slice %55 {offsets = [48, 0], sizes = [8, 128], strides = [1, 1]} : vector<64x128xf32> to vector<8x128xf32>
    %cst_28 = arith.constant dense<0.000000e+00> : vector<8x128xf32>
    %181 = tpu.matmul %179, %57, %cst_28 {dimension_numbers = #tpu.dot_dimension_numbers<[1], [0], [0], [1], [0, 0, 1, 1], [], []>} : vector<8x32xf32>, vector<32x128xf32>, vector<8x128xf32> -> vector<8x128xf32>
    %182 = arith.addf %180, %181 : vector<8x128xf32>
    %183 = arith.mulf %182, %8 : vector<8x128xf32>
    %184 = arith.negf %183 : vector<8x128xf32>
    %185 = math.exp %184 : vector<8x128xf32>
    %cst_29 = arith.constant 1.000000e+00 : f32
    %186 = vector.broadcast %cst_29 : f32 to vector<8x128xf32>
    %187 = arith.addf %186, %185 : vector<8x128xf32>
    %188 = arith.divf %186, %187 : vector<8x128xf32>
    %189 = arith.mulf %188, %8 : vector<8x128xf32>
    %190 = arith.addf %189, %11 : vector<8x128xf32>
    %191 = vector.extract_strided_slice %190 {offsets = [0, 0], sizes = [8, 32], strides = [1, 1]} : vector<8x128xf32> to vector<8x32xf32>
    %192 = vector.extract_strided_slice %190 {offsets = [0, 32], sizes = [8, 32], strides = [1, 1]} : vector<8x128xf32> to vector<8x32xf32>
    %193 = vector.extract_strided_slice %190 {offsets = [0, 64], sizes = [8, 32], strides = [1, 1]} : vector<8x128xf32> to vector<8x32xf32>
    %194 = vector.extract_strided_slice %190 {offsets = [0, 96], sizes = [8, 32], strides = [1, 1]} : vector<8x128xf32> to vector<8x32xf32>
    %195 = arith.mulf %192, %177 : vector<8x32xf32>
    %196 = arith.mulf %191, %193 : vector<8x32xf32>
    %197 = arith.addf %195, %196 : vector<8x32xf32>
    %198 = math.tanh %197 : vector<8x32xf32>
    %199 = arith.mulf %194, %198 : vector<8x32xf32>
    %200 = vector.extract_strided_slice %55 {offsets = [56, 0], sizes = [8, 128], strides = [1, 1]} : vector<64x128xf32> to vector<8x128xf32>
    %cst_30 = arith.constant dense<0.000000e+00> : vector<8x128xf32>
    %201 = tpu.matmul %199, %57, %cst_30 {dimension_numbers = #tpu.dot_dimension_numbers<[1], [0], [0], [1], [0, 0, 1, 1], [], []>} : vector<8x32xf32>, vector<32x128xf32>, vector<8x128xf32> -> vector<8x128xf32>
    %202 = arith.addf %200, %201 : vector<8x128xf32>
    %203 = arith.mulf %202, %8 : vector<8x128xf32>
    %204 = arith.negf %203 : vector<8x128xf32>
    %205 = math.exp %204 : vector<8x128xf32>
    %cst_31 = arith.constant 1.000000e+00 : f32
    %206 = vector.broadcast %cst_31 : f32 to vector<8x128xf32>
    %207 = arith.addf %206, %205 : vector<8x128xf32>
    %208 = arith.divf %206, %207 : vector<8x128xf32>
    %209 = arith.mulf %208, %8 : vector<8x128xf32>
    %210 = arith.addf %209, %11 : vector<8x128xf32>
    %211 = vector.extract_strided_slice %210 {offsets = [0, 0], sizes = [8, 32], strides = [1, 1]} : vector<8x128xf32> to vector<8x32xf32>
    %212 = vector.extract_strided_slice %210 {offsets = [0, 32], sizes = [8, 32], strides = [1, 1]} : vector<8x128xf32> to vector<8x32xf32>
    %213 = vector.extract_strided_slice %210 {offsets = [0, 64], sizes = [8, 32], strides = [1, 1]} : vector<8x128xf32> to vector<8x32xf32>
    %214 = vector.extract_strided_slice %210 {offsets = [0, 96], sizes = [8, 32], strides = [1, 1]} : vector<8x128xf32> to vector<8x32xf32>
    %215 = arith.mulf %212, %197 : vector<8x32xf32>
    %216 = arith.mulf %211, %213 : vector<8x32xf32>
    %217 = arith.addf %215, %216 : vector<8x32xf32>
    %218 = math.tanh %217 : vector<8x32xf32>
    %219 = arith.mulf %214, %218 : vector<8x32xf32>
    %220 = tpu.concatenate %79, %99, %119, %139, %159, %179, %199, %219 in 0 : vector<8x32xf32>, vector<8x32xf32>, vector<8x32xf32>, vector<8x32xf32>, vector<8x32xf32>, vector<8x32xf32>, vector<8x32xf32>, vector<8x32xf32> -> vector<64x32xf32>
    %c0_32 = arith.constant 0 : index
    %c0_33 = arith.constant 0 : index
    %c0_34 = arith.constant 0 : index
    %221 = vector.load %arg3[%c0_32, %c0_33, %c0_34] : memref<1x32x128xf32, #tpu.memory_space<vmem>>, vector<1x32x128xf32>
    %222 = vector.shape_cast %221 : vector<1x32x128xf32> to vector<32x128xf32>
    %cst_35 = arith.constant dense<0.000000e+00> : vector<64x128xf32>
    %223 = tpu.matmul %220, %222, %cst_35 {dimension_numbers = #tpu.dot_dimension_numbers<[1], [0], [0], [1], [0, 0, 1, 1], [], []>} : vector<64x32xf32>, vector<32x128xf32>, vector<64x128xf32> -> vector<64x128xf32>
    %c1 = arith.constant 1 : index
    %c0_36 = arith.constant 0 : index
    %c0_37 = arith.constant 0 : index
    %224 = vector.load %arg5[%c1, %c0_36, %c0_37] : memref<2x1x128xf32, #tpu.memory_space<vmem>>, vector<1x1x128xf32>
    %225 = vector.shape_cast %224 : vector<1x1x128xf32> to vector<1x128xf32>
    %226 = vector.broadcast %225 : vector<1x128xf32> to vector<64x128xf32>
    %227 = arith.addf %223, %226 : vector<64x128xf32>
    %c1_38 = arith.constant 1 : index
    %c0_39 = arith.constant 0 : index
    %c0_40 = arith.constant 0 : index
    %228 = vector.load %arg4[%c1_38, %c0_39, %c0_40] : memref<2x32x128xf32, #tpu.memory_space<vmem>>, vector<1x32x128xf32>
    %229 = vector.shape_cast %228 : vector<1x32x128xf32> to vector<32x128xf32>
    %cst_41 = arith.constant 0.000000e+00 : f32
    %230 = vector.broadcast %cst_41 : f32 to vector<8x32xf32>
    %cst_42 = arith.constant 0.000000e+00 : f32
    %231 = vector.broadcast %cst_42 : f32 to vector<8x32xf32>
    %232 = vector.extract_strided_slice %227 {offsets = [0, 0], sizes = [8, 128], strides = [1, 1]} : vector<64x128xf32> to vector<8x128xf32>
    %cst_43 = arith.constant dense<0.000000e+00> : vector<8x128xf32>
    %233 = tpu.matmul %230, %229, %cst_43 {dimension_numbers = #tpu.dot_dimension_numbers<[1], [0], [0], [1], [0, 0, 1, 1], [], []>} : vector<8x32xf32>, vector<32x128xf32>, vector<8x128xf32> -> vector<8x128xf32>
    %234 = arith.addf %232, %233 : vector<8x128xf32>
    %235 = arith.mulf %234, %8 : vector<8x128xf32>
    %236 = arith.negf %235 : vector<8x128xf32>
    %237 = math.exp %236 : vector<8x128xf32>
    %cst_44 = arith.constant 1.000000e+00 : f32
    %238 = vector.broadcast %cst_44 : f32 to vector<8x128xf32>
    %239 = arith.addf %238, %237 : vector<8x128xf32>
    %240 = arith.divf %238, %239 : vector<8x128xf32>
    %241 = arith.mulf %240, %8 : vector<8x128xf32>
    %242 = arith.addf %241, %11 : vector<8x128xf32>
    %243 = vector.extract_strided_slice %242 {offsets = [0, 0], sizes = [8, 32], strides = [1, 1]} : vector<8x128xf32> to vector<8x32xf32>
    %244 = vector.extract_strided_slice %242 {offsets = [0, 32], sizes = [8, 32], strides = [1, 1]} : vector<8x128xf32> to vector<8x32xf32>
    %245 = vector.extract_strided_slice %242 {offsets = [0, 64], sizes = [8, 32], strides = [1, 1]} : vector<8x128xf32> to vector<8x32xf32>
    %246 = vector.extract_strided_slice %242 {offsets = [0, 96], sizes = [8, 32], strides = [1, 1]} : vector<8x128xf32> to vector<8x32xf32>
    %247 = arith.mulf %244, %231 : vector<8x32xf32>
    %248 = arith.mulf %243, %245 : vector<8x32xf32>
    %249 = arith.addf %247, %248 : vector<8x32xf32>
    %250 = math.tanh %249 : vector<8x32xf32>
    %251 = arith.mulf %246, %250 : vector<8x32xf32>
    %252 = vector.extract_strided_slice %251 {offsets = [7, 0], sizes = [1, 32], strides = [1, 1]} : vector<8x32xf32> to vector<1x32xf32>
    %253 = vector.broadcast %16 : vector<8x1xf32> to vector<8x32xf32>
    %254 = vector.broadcast %252 : vector<1x32xf32> to vector<8x32xf32>
    %255 = arith.mulf %253, %254 : vector<8x32xf32>
    %256 = arith.addf %45, %255 : vector<8x32xf32>
    %257 = vector.extract_strided_slice %227 {offsets = [8, 0], sizes = [8, 128], strides = [1, 1]} : vector<64x128xf32> to vector<8x128xf32>
    %cst_45 = arith.constant dense<0.000000e+00> : vector<8x128xf32>
    %258 = tpu.matmul %251, %229, %cst_45 {dimension_numbers = #tpu.dot_dimension_numbers<[1], [0], [0], [1], [0, 0, 1, 1], [], []>} : vector<8x32xf32>, vector<32x128xf32>, vector<8x128xf32> -> vector<8x128xf32>
    %259 = arith.addf %257, %258 : vector<8x128xf32>
    %260 = arith.mulf %259, %8 : vector<8x128xf32>
    %261 = arith.negf %260 : vector<8x128xf32>
    %262 = math.exp %261 : vector<8x128xf32>
    %cst_46 = arith.constant 1.000000e+00 : f32
    %263 = vector.broadcast %cst_46 : f32 to vector<8x128xf32>
    %264 = arith.addf %263, %262 : vector<8x128xf32>
    %265 = arith.divf %263, %264 : vector<8x128xf32>
    %266 = arith.mulf %265, %8 : vector<8x128xf32>
    %267 = arith.addf %266, %11 : vector<8x128xf32>
    %268 = vector.extract_strided_slice %267 {offsets = [0, 0], sizes = [8, 32], strides = [1, 1]} : vector<8x128xf32> to vector<8x32xf32>
    %269 = vector.extract_strided_slice %267 {offsets = [0, 32], sizes = [8, 32], strides = [1, 1]} : vector<8x128xf32> to vector<8x32xf32>
    %270 = vector.extract_strided_slice %267 {offsets = [0, 64], sizes = [8, 32], strides = [1, 1]} : vector<8x128xf32> to vector<8x32xf32>
    %271 = vector.extract_strided_slice %267 {offsets = [0, 96], sizes = [8, 32], strides = [1, 1]} : vector<8x128xf32> to vector<8x32xf32>
    %272 = arith.mulf %269, %249 : vector<8x32xf32>
    %273 = arith.mulf %268, %270 : vector<8x32xf32>
    %274 = arith.addf %272, %273 : vector<8x32xf32>
    %275 = math.tanh %274 : vector<8x32xf32>
    %276 = arith.mulf %271, %275 : vector<8x32xf32>
    %277 = vector.extract_strided_slice %276 {offsets = [7, 0], sizes = [1, 32], strides = [1, 1]} : vector<8x32xf32> to vector<1x32xf32>
    %278 = vector.broadcast %20 : vector<8x1xf32> to vector<8x32xf32>
    %279 = vector.broadcast %277 : vector<1x32xf32> to vector<8x32xf32>
    %280 = arith.mulf %278, %279 : vector<8x32xf32>
    %281 = arith.addf %256, %280 : vector<8x32xf32>
    %282 = vector.extract_strided_slice %227 {offsets = [16, 0], sizes = [8, 128], strides = [1, 1]} : vector<64x128xf32> to vector<8x128xf32>
    %cst_47 = arith.constant dense<0.000000e+00> : vector<8x128xf32>
    %283 = tpu.matmul %276, %229, %cst_47 {dimension_numbers = #tpu.dot_dimension_numbers<[1], [0], [0], [1], [0, 0, 1, 1], [], []>} : vector<8x32xf32>, vector<32x128xf32>, vector<8x128xf32> -> vector<8x128xf32>
    %284 = arith.addf %282, %283 : vector<8x128xf32>
    %285 = arith.mulf %284, %8 : vector<8x128xf32>
    %286 = arith.negf %285 : vector<8x128xf32>
    %287 = math.exp %286 : vector<8x128xf32>
    %cst_48 = arith.constant 1.000000e+00 : f32
    %288 = vector.broadcast %cst_48 : f32 to vector<8x128xf32>
    %289 = arith.addf %288, %287 : vector<8x128xf32>
    %290 = arith.divf %288, %289 : vector<8x128xf32>
    %291 = arith.mulf %290, %8 : vector<8x128xf32>
    %292 = arith.addf %291, %11 : vector<8x128xf32>
    %293 = vector.extract_strided_slice %292 {offsets = [0, 0], sizes = [8, 32], strides = [1, 1]} : vector<8x128xf32> to vector<8x32xf32>
    %294 = vector.extract_strided_slice %292 {offsets = [0, 32], sizes = [8, 32], strides = [1, 1]} : vector<8x128xf32> to vector<8x32xf32>
    %295 = vector.extract_strided_slice %292 {offsets = [0, 64], sizes = [8, 32], strides = [1, 1]} : vector<8x128xf32> to vector<8x32xf32>
    %296 = vector.extract_strided_slice %292 {offsets = [0, 96], sizes = [8, 32], strides = [1, 1]} : vector<8x128xf32> to vector<8x32xf32>
    %297 = arith.mulf %294, %274 : vector<8x32xf32>
    %298 = arith.mulf %293, %295 : vector<8x32xf32>
    %299 = arith.addf %297, %298 : vector<8x32xf32>
    %300 = math.tanh %299 : vector<8x32xf32>
    %301 = arith.mulf %296, %300 : vector<8x32xf32>
    %302 = vector.extract_strided_slice %301 {offsets = [7, 0], sizes = [1, 32], strides = [1, 1]} : vector<8x32xf32> to vector<1x32xf32>
    %303 = vector.broadcast %24 : vector<8x1xf32> to vector<8x32xf32>
    %304 = vector.broadcast %302 : vector<1x32xf32> to vector<8x32xf32>
    %305 = arith.mulf %303, %304 : vector<8x32xf32>
    %306 = arith.addf %281, %305 : vector<8x32xf32>
    %307 = vector.extract_strided_slice %227 {offsets = [24, 0], sizes = [8, 128], strides = [1, 1]} : vector<64x128xf32> to vector<8x128xf32>
    %cst_49 = arith.constant dense<0.000000e+00> : vector<8x128xf32>
    %308 = tpu.matmul %301, %229, %cst_49 {dimension_numbers = #tpu.dot_dimension_numbers<[1], [0], [0], [1], [0, 0, 1, 1], [], []>} : vector<8x32xf32>, vector<32x128xf32>, vector<8x128xf32> -> vector<8x128xf32>
    %309 = arith.addf %307, %308 : vector<8x128xf32>
    %310 = arith.mulf %309, %8 : vector<8x128xf32>
    %311 = arith.negf %310 : vector<8x128xf32>
    %312 = math.exp %311 : vector<8x128xf32>
    %cst_50 = arith.constant 1.000000e+00 : f32
    %313 = vector.broadcast %cst_50 : f32 to vector<8x128xf32>
    %314 = arith.addf %313, %312 : vector<8x128xf32>
    %315 = arith.divf %313, %314 : vector<8x128xf32>
    %316 = arith.mulf %315, %8 : vector<8x128xf32>
    %317 = arith.addf %316, %11 : vector<8x128xf32>
    %318 = vector.extract_strided_slice %317 {offsets = [0, 0], sizes = [8, 32], strides = [1, 1]} : vector<8x128xf32> to vector<8x32xf32>
    %319 = vector.extract_strided_slice %317 {offsets = [0, 32], sizes = [8, 32], strides = [1, 1]} : vector<8x128xf32> to vector<8x32xf32>
    %320 = vector.extract_strided_slice %317 {offsets = [0, 64], sizes = [8, 32], strides = [1, 1]} : vector<8x128xf32> to vector<8x32xf32>
    %321 = vector.extract_strided_slice %317 {offsets = [0, 96], sizes = [8, 32], strides = [1, 1]} : vector<8x128xf32> to vector<8x32xf32>
    %322 = arith.mulf %319, %299 : vector<8x32xf32>
    %323 = arith.mulf %318, %320 : vector<8x32xf32>
    %324 = arith.addf %322, %323 : vector<8x32xf32>
    %325 = math.tanh %324 : vector<8x32xf32>
    %326 = arith.mulf %321, %325 : vector<8x32xf32>
    %327 = vector.extract_strided_slice %326 {offsets = [7, 0], sizes = [1, 32], strides = [1, 1]} : vector<8x32xf32> to vector<1x32xf32>
    %328 = vector.broadcast %28 : vector<8x1xf32> to vector<8x32xf32>
    %329 = vector.broadcast %327 : vector<1x32xf32> to vector<8x32xf32>
    %330 = arith.mulf %328, %329 : vector<8x32xf32>
    %331 = arith.addf %306, %330 : vector<8x32xf32>
    %332 = vector.extract_strided_slice %227 {offsets = [32, 0], sizes = [8, 128], strides = [1, 1]} : vector<64x128xf32> to vector<8x128xf32>
    %cst_51 = arith.constant dense<0.000000e+00> : vector<8x128xf32>
    %333 = tpu.matmul %326, %229, %cst_51 {dimension_numbers = #tpu.dot_dimension_numbers<[1], [0], [0], [1], [0, 0, 1, 1], [], []>} : vector<8x32xf32>, vector<32x128xf32>, vector<8x128xf32> -> vector<8x128xf32>
    %334 = arith.addf %332, %333 : vector<8x128xf32>
    %335 = arith.mulf %334, %8 : vector<8x128xf32>
    %336 = arith.negf %335 : vector<8x128xf32>
    %337 = math.exp %336 : vector<8x128xf32>
    %cst_52 = arith.constant 1.000000e+00 : f32
    %338 = vector.broadcast %cst_52 : f32 to vector<8x128xf32>
    %339 = arith.addf %338, %337 : vector<8x128xf32>
    %340 = arith.divf %338, %339 : vector<8x128xf32>
    %341 = arith.mulf %340, %8 : vector<8x128xf32>
    %342 = arith.addf %341, %11 : vector<8x128xf32>
    %343 = vector.extract_strided_slice %342 {offsets = [0, 0], sizes = [8, 32], strides = [1, 1]} : vector<8x128xf32> to vector<8x32xf32>
    %344 = vector.extract_strided_slice %342 {offsets = [0, 32], sizes = [8, 32], strides = [1, 1]} : vector<8x128xf32> to vector<8x32xf32>
    %345 = vector.extract_strided_slice %342 {offsets = [0, 64], sizes = [8, 32], strides = [1, 1]} : vector<8x128xf32> to vector<8x32xf32>
    %346 = vector.extract_strided_slice %342 {offsets = [0, 96], sizes = [8, 32], strides = [1, 1]} : vector<8x128xf32> to vector<8x32xf32>
    %347 = arith.mulf %344, %324 : vector<8x32xf32>
    %348 = arith.mulf %343, %345 : vector<8x32xf32>
    %349 = arith.addf %347, %348 : vector<8x32xf32>
    %350 = math.tanh %349 : vector<8x32xf32>
    %351 = arith.mulf %346, %350 : vector<8x32xf32>
    %352 = vector.extract_strided_slice %351 {offsets = [7, 0], sizes = [1, 32], strides = [1, 1]} : vector<8x32xf32> to vector<1x32xf32>
    %353 = vector.broadcast %32 : vector<8x1xf32> to vector<8x32xf32>
    %354 = vector.broadcast %352 : vector<1x32xf32> to vector<8x32xf32>
    %355 = arith.mulf %353, %354 : vector<8x32xf32>
    %356 = arith.addf %331, %355 : vector<8x32xf32>
    %357 = vector.extract_strided_slice %227 {offsets = [40, 0], sizes = [8, 128], strides = [1, 1]} : vector<64x128xf32> to vector<8x128xf32>
    %cst_53 = arith.constant dense<0.000000e+00> : vector<8x128xf32>
    %358 = tpu.matmul %351, %229, %cst_53 {dimension_numbers = #tpu.dot_dimension_numbers<[1], [0], [0], [1], [0, 0, 1, 1], [], []>} : vector<8x32xf32>, vector<32x128xf32>, vector<8x128xf32> -> vector<8x128xf32>
    %359 = arith.addf %357, %358 : vector<8x128xf32>
    %360 = arith.mulf %359, %8 : vector<8x128xf32>
    %361 = arith.negf %360 : vector<8x128xf32>
    %362 = math.exp %361 : vector<8x128xf32>
    %cst_54 = arith.constant 1.000000e+00 : f32
    %363 = vector.broadcast %cst_54 : f32 to vector<8x128xf32>
    %364 = arith.addf %363, %362 : vector<8x128xf32>
    %365 = arith.divf %363, %364 : vector<8x128xf32>
    %366 = arith.mulf %365, %8 : vector<8x128xf32>
    %367 = arith.addf %366, %11 : vector<8x128xf32>
    %368 = vector.extract_strided_slice %367 {offsets = [0, 0], sizes = [8, 32], strides = [1, 1]} : vector<8x128xf32> to vector<8x32xf32>
    %369 = vector.extract_strided_slice %367 {offsets = [0, 32], sizes = [8, 32], strides = [1, 1]} : vector<8x128xf32> to vector<8x32xf32>
    %370 = vector.extract_strided_slice %367 {offsets = [0, 64], sizes = [8, 32], strides = [1, 1]} : vector<8x128xf32> to vector<8x32xf32>
    %371 = vector.extract_strided_slice %367 {offsets = [0, 96], sizes = [8, 32], strides = [1, 1]} : vector<8x128xf32> to vector<8x32xf32>
    %372 = arith.mulf %369, %349 : vector<8x32xf32>
    %373 = arith.mulf %368, %370 : vector<8x32xf32>
    %374 = arith.addf %372, %373 : vector<8x32xf32>
    %375 = math.tanh %374 : vector<8x32xf32>
    %376 = arith.mulf %371, %375 : vector<8x32xf32>
    %377 = vector.extract_strided_slice %376 {offsets = [7, 0], sizes = [1, 32], strides = [1, 1]} : vector<8x32xf32> to vector<1x32xf32>
    %378 = vector.broadcast %36 : vector<8x1xf32> to vector<8x32xf32>
    %379 = vector.broadcast %377 : vector<1x32xf32> to vector<8x32xf32>
    %380 = arith.mulf %378, %379 : vector<8x32xf32>
    %381 = arith.addf %356, %380 : vector<8x32xf32>
    %382 = vector.extract_strided_slice %227 {offsets = [48, 0], sizes = [8, 128], strides = [1, 1]} : vector<64x128xf32> to vector<8x128xf32>
    %cst_55 = arith.constant dense<0.000000e+00> : vector<8x128xf32>
    %383 = tpu.matmul %376, %229, %cst_55 {dimension_numbers = #tpu.dot_dimension_numbers<[1], [0], [0], [1], [0, 0, 1, 1], [], []>} : vector<8x32xf32>, vector<32x128xf32>, vector<8x128xf32> -> vector<8x128xf32>
    %384 = arith.addf %382, %383 : vector<8x128xf32>
    %385 = arith.mulf %384, %8 : vector<8x128xf32>
    %386 = arith.negf %385 : vector<8x128xf32>
    %387 = math.exp %386 : vector<8x128xf32>
    %cst_56 = arith.constant 1.000000e+00 : f32
    %388 = vector.broadcast %cst_56 : f32 to vector<8x128xf32>
    %389 = arith.addf %388, %387 : vector<8x128xf32>
    %390 = arith.divf %388, %389 : vector<8x128xf32>
    %391 = arith.mulf %390, %8 : vector<8x128xf32>
    %392 = arith.addf %391, %11 : vector<8x128xf32>
    %393 = vector.extract_strided_slice %392 {offsets = [0, 0], sizes = [8, 32], strides = [1, 1]} : vector<8x128xf32> to vector<8x32xf32>
    %394 = vector.extract_strided_slice %392 {offsets = [0, 32], sizes = [8, 32], strides = [1, 1]} : vector<8x128xf32> to vector<8x32xf32>
    %395 = vector.extract_strided_slice %392 {offsets = [0, 64], sizes = [8, 32], strides = [1, 1]} : vector<8x128xf32> to vector<8x32xf32>
    %396 = vector.extract_strided_slice %392 {offsets = [0, 96], sizes = [8, 32], strides = [1, 1]} : vector<8x128xf32> to vector<8x32xf32>
    %397 = arith.mulf %394, %374 : vector<8x32xf32>
    %398 = arith.mulf %393, %395 : vector<8x32xf32>
    %399 = arith.addf %397, %398 : vector<8x32xf32>
    %400 = math.tanh %399 : vector<8x32xf32>
    %401 = arith.mulf %396, %400 : vector<8x32xf32>
    %402 = vector.extract_strided_slice %401 {offsets = [7, 0], sizes = [1, 32], strides = [1, 1]} : vector<8x32xf32> to vector<1x32xf32>
    %403 = vector.broadcast %40 : vector<8x1xf32> to vector<8x32xf32>
    %404 = vector.broadcast %402 : vector<1x32xf32> to vector<8x32xf32>
    %405 = arith.mulf %403, %404 : vector<8x32xf32>
    %406 = arith.addf %381, %405 : vector<8x32xf32>
    %407 = vector.extract_strided_slice %227 {offsets = [56, 0], sizes = [8, 128], strides = [1, 1]} : vector<64x128xf32> to vector<8x128xf32>
    %cst_57 = arith.constant dense<0.000000e+00> : vector<8x128xf32>
    %408 = tpu.matmul %401, %229, %cst_57 {dimension_numbers = #tpu.dot_dimension_numbers<[1], [0], [0], [1], [0, 0, 1, 1], [], []>} : vector<8x32xf32>, vector<32x128xf32>, vector<8x128xf32> -> vector<8x128xf32>
    %409 = arith.addf %407, %408 : vector<8x128xf32>
    %410 = arith.mulf %409, %8 : vector<8x128xf32>
    %411 = arith.negf %410 : vector<8x128xf32>
    %412 = math.exp %411 : vector<8x128xf32>
    %cst_58 = arith.constant 1.000000e+00 : f32
    %413 = vector.broadcast %cst_58 : f32 to vector<8x128xf32>
    %414 = arith.addf %413, %412 : vector<8x128xf32>
    %415 = arith.divf %413, %414 : vector<8x128xf32>
    %416 = arith.mulf %415, %8 : vector<8x128xf32>
    %417 = arith.addf %416, %11 : vector<8x128xf32>
    %418 = vector.extract_strided_slice %417 {offsets = [0, 0], sizes = [8, 32], strides = [1, 1]} : vector<8x128xf32> to vector<8x32xf32>
    %419 = vector.extract_strided_slice %417 {offsets = [0, 32], sizes = [8, 32], strides = [1, 1]} : vector<8x128xf32> to vector<8x32xf32>
    %420 = vector.extract_strided_slice %417 {offsets = [0, 64], sizes = [8, 32], strides = [1, 1]} : vector<8x128xf32> to vector<8x32xf32>
    %421 = vector.extract_strided_slice %417 {offsets = [0, 96], sizes = [8, 32], strides = [1, 1]} : vector<8x128xf32> to vector<8x32xf32>
    %422 = arith.mulf %419, %399 : vector<8x32xf32>
    %423 = arith.mulf %418, %420 : vector<8x32xf32>
    %424 = arith.addf %422, %423 : vector<8x32xf32>
    %425 = math.tanh %424 : vector<8x32xf32>
    %426 = arith.mulf %421, %425 : vector<8x32xf32>
    %427 = vector.extract_strided_slice %426 {offsets = [7, 0], sizes = [1, 32], strides = [1, 1]} : vector<8x32xf32> to vector<1x32xf32>
    %428 = vector.broadcast %44 : vector<8x1xf32> to vector<8x32xf32>
    %429 = vector.broadcast %427 : vector<1x32xf32> to vector<8x32xf32>
    %430 = arith.mulf %428, %429 : vector<8x32xf32>
    %431 = arith.addf %406, %430 : vector<8x32xf32>
    %c0_59 = arith.constant 0 : index
    %c0_60 = arith.constant 0 : index
    %432 = vector.load %arg6[%c0_59, %c0_60] : memref<32x128xf32, #tpu.memory_space<vmem>>, vector<32x128xf32>
    %cst_61 = arith.constant dense<0.000000e+00> : vector<8x128xf32>
    %433 = tpu.matmul %431, %432, %cst_61 {dimension_numbers = #tpu.dot_dimension_numbers<[1], [0], [0], [1], [0, 0, 1, 1], [], []>} : vector<8x32xf32>, vector<32x128xf32>, vector<8x128xf32> -> vector<8x128xf32>
    %c0_62 = arith.constant 0 : index
    %c0_63 = arith.constant 0 : index
    %434 = vector.load %arg7[%c0_62, %c0_63] : memref<1x128xf32, #tpu.memory_space<vmem>>, vector<1x128xf32>
    %435 = vector.broadcast %434 : vector<1x128xf32> to vector<8x128xf32>
    %436 = arith.addf %433, %435 : vector<8x128xf32>
    %c0_64 = arith.constant 0 : index
    %c0_65 = arith.constant 0 : index
    %c0_66 = arith.constant 0 : index
    %437 = vector.load %arg8[%c0_64, %c0_65, %c0_66] : memref<1x8x128xf32, #tpu.memory_space<vmem>>, vector<1x8x128xf32>
    %438 = vector.shape_cast %437 : vector<1x8x128xf32> to vector<8x128xf32>
    %439 = vector.shape_cast %436 : vector<8x128xf32> to vector<1x8x128xf32>
    tpu.vector_store %arg8[%c0_64, %c0_65, %c0_66], %439 {strides = array<i32>} : memref<1x8x128xf32, #tpu.memory_space<vmem>>, vector<1x8x128xf32>,
    return
  }
  func.func @transform_0(%arg0: i32) -> (i32, i32, i32) {
    %c0_i32 = arith.constant 0 : i32
    %c0_i32_0 = arith.constant 0 : i32
    %c0_i32_1 = arith.constant 0 : i32
    return %arg0, %c0_i32, %c0_i32_0 : i32, i32, i32
  }
  func.func @transform_1(%arg0: i32) -> (i32, i32) {
    %c0_i32 = arith.constant 0 : i32
    %c0_i32_0 = arith.constant 0 : i32
    %c0_i32_1 = arith.constant 0 : i32
    return %c0_i32, %c0_i32_0 : i32, i32
  }
  func.func @transform_2(%arg0: i32) -> (i32, i32, i32) {
    %c0_i32 = arith.constant 0 : i32
    %c0_i32_0 = arith.constant 0 : i32
    %c0_i32_1 = arith.constant 0 : i32
    %c0_i32_2 = arith.constant 0 : i32
    return %c0_i32, %c0_i32_0, %c0_i32_1 : i32, i32, i32
  }
  func.func @transform_3(%arg0: i32) -> (i32, i32, i32) {
    %c0_i32 = arith.constant 0 : i32
    %c0_i32_0 = arith.constant 0 : i32
    %c0_i32_1 = arith.constant 0 : i32
    %c0_i32_2 = arith.constant 0 : i32
    return %c0_i32, %c0_i32_0, %c0_i32_1 : i32, i32, i32
  }
  func.func @transform_4(%arg0: i32) -> (i32, i32, i32) {
    %c0_i32 = arith.constant 0 : i32
    %c0_i32_0 = arith.constant 0 : i32
    %c0_i32_1 = arith.constant 0 : i32
    %c0_i32_2 = arith.constant 0 : i32
    return %c0_i32, %c0_i32_0, %c0_i32_1 : i32, i32, i32
  }
  func.func @transform_5(%arg0: i32) -> (i32, i32) {
    %c0_i32 = arith.constant 0 : i32
    %c0_i32_0 = arith.constant 0 : i32
    %c0_i32_1 = arith.constant 0 : i32
    return %c0_i32, %c0_i32_0 : i32, i32
  }
  func.func @transform_6(%arg0: i32) -> (i32, i32) {
    %c0_i32 = arith.constant 0 : i32
    %c0_i32_0 = arith.constant 0 : i32
    %c0_i32_1 = arith.constant 0 : i32
    return %c0_i32, %c0_i32_0 : i32, i32
  }
  func.func @transform_7(%arg0: i32) -> (i32, i32, i32) {
    %c0_i32 = arith.constant 0 : i32
    %c0_i32_0 = arith.constant 0 : i32
    %c0_i32_1 = arith.constant 0 : i32
    return %arg0, %c0_i32, %c0_i32_0 : i32, i32, i32
  }
}

</mosaic_0001>

<llo_original>
// kernel: tpu_custom_call.1
$region0: #{tpu_custom_call.1}
  #allocation0 [shape = 'u32[]', space=smem, size = 0x4, offset = 0x4, fixed_abs, tag = 'smem constant byte address 0x4 - core index']
  #allocation1 [shape = 'u32[144,128]{1,0:T(1,128)}', space=vmem, size = 0x12000, scoped, tag = 'internal scratch']
  %s0 = inlined_call_operand.vmem [shape: f32[2,64,1], index: 0, kind: input, shape index: {}]
  %s1 = inlined_call_operand.vmem [shape: f32[1,128], index: 1, kind: input, shape index: {}]
  %s2 = inlined_call_operand.vmem [shape: f32[1,32,128], index: 2, kind: input, shape index: {}]
  %s3 = inlined_call_operand.vmem [shape: f32[2,32,128], index: 3, kind: input, shape index: {}]
  %s4 = inlined_call_operand.vmem [shape: f32[2,1,128], index: 4, kind: input, shape index: {}]
  %s5 = inlined_call_operand.vmem [shape: f32[32,128], index: 5, kind: input, shape index: {}]
  %s6 = inlined_call_operand.vmem [shape: f32[1,128], index: 6, kind: input, shape index: {}]
  %s7 = inlined_call_operand.hbm [shape: f32[2,8,128], index: 7, kind: output, shape index: {}]
  %s8 = sld [smem:[#allocation0]]
  $region61: #{tpu_custom_call.1} parent=0
    _
  %s10 = ssub.s32 1, %s8
  %s11 = scalar_select 0, %s10, %s8
  $region1: #{tpu_custom_call.1} parent=0
    #allocation2 [shape = 'u8[8192]{0}', space=vmem, size = 0x2000, scoped, tag = 'output window, operand 0']
    #allocation3 [shape = 's32[2]{0}', space=sflag, size = 0x8, scoped, tag = 'scoped memory for tpu_custom_call.1']
    %12 = vsyncpa [#allocation3], 0
    %s13 = scalar_lea.sflag [#allocation3], 1
    %14 = vsyncpa %s13, 0
    loop: start=0, step=1, limit=4
    $region2: #{tpu_custom_call.1} parent=1 // loop_pre_header
      _
    $region3: #{tpu_custom_call.1} parent=1 // loop_header
      %s16 = sphi 0, %s20
      %p17 = scmp.ge.s32.totalorder %s16, 4
      %s26 = sphi 0, %s28
      %s29 = sphi 0, %s26
      %s30 = sphi 0, %s29
      %s46 = sphi 0, %s30
      %s50 = sphi 0, %s50
      %s52 = sphi 0, %s50
      %s53 = sphi 0, %s52
      %s67 = sphi 0, %s53
      %s71 = sphi 0, %s71
      %s73 = sphi 0, %s71
      %s74 = sphi 0, %s73
      %s88 = sphi 0, %s74
      %s92 = sphi 0, %s92
      %s94 = sphi 0, %s92
      %s95 = sphi 0, %s94
      %s109 = sphi 0, %s95
      %s113 = sphi 0, %s113
      %s115 = sphi 0, %s113
      %s116 = sphi 0, %s115
      %s130 = sphi 0, %s116
      %s134 = sphi 0, %s134
      %s136 = sphi 0, %s134
      %s137 = sphi 0, %s136
      %s151 = sphi 0, %s137
      %s155 = sphi 0, %s155
      %s157 = sphi 0, %s155
      %s158 = sphi 0, %s157
      %s172 = sphi 0, %s158
      %s178 = sphi 0, %s180
      %s181 = sphi 0, %s178
      %s182 = sphi 0, %s181
      %s198 = sphi 0, %s182
    $region4: #{tpu_custom_call.1} parent=1 // loop_header_branch
      %19 = sbr.rel (%p17) target = $region8
    $region5: #{tpu_custom_call.1} parent=1 // loop_body
      %s21 = ssub.s32 %s16, 1
      %s22 = ssub.s32 %s16, 2
      %s23 = sadd.s32 %s16, 1
      %s24 = ssub.s32 %s16, %s23
      %p25 = scmp.eq.s32.totalorder %s24, 0
      %s27 = sadd.s32 %s26, 1
      %s28 = scalar_select %p25, %s26, %s27
      %p31 = pneg %p25
      %p32 = scmp.eq.s32.totalorder %s16, 1
      %p33 = por %p31, %p32
      %p34 = scmp.ne.s32.totalorder %s26, %s29
      %p35 = scmp.eq.s32.totalorder %s16, 0
      %p36 = por %p34, %p35
      %p37 = scmp.ne.s32.totalorder %s26, %s29
      %p38 = scmp.eq.s32.totalorder %s21, 1
      %p39 = por %p37, %p38
      %p40 = scmp.ne.s32.totalorder %s29, %s30
      %p41 = scmp.eq.s32.totalorder %s21, 0
      %p42 = por %p40, %p41
      %p43 = scmp.ne.s32.totalorder %s29, %s30
      %p44 = scmp.eq.s32.totalorder %s22, 1
      %p45 = por %p43, %p44
      %p47 = scmp.ne.s32.totalorder %s30, %s46
      %p48 = scmp.eq.s32.totalorder %s22, 0
      %p49 = por %p47, %p48
      %s51 = sadd.s32 %s50, 1
      %p54 = scmp.eq.s32.totalorder %s16, 1
      %p55 = scmp.ne.s32.totalorder %s50, %s52
      %p56 = scmp.eq.s32.totalorder %s16, 0
      %p57 = por %p55, %p56
      %p58 = scmp.ne.s32.totalorder %s50, %s52
      %p59 = scmp.eq.s32.totalorder %s21, 1
      %p60 = por %p58, %p59
      %p61 = scmp.ne.s32.totalorder %s52, %s53
      %p62 = scmp.eq.s32.totalorder %s21, 0
      %p63 = por %p61, %p62
      %p64 = scmp.ne.s32.totalorder %s52, %s53
      %p65 = scmp.eq.s32.totalorder %s22, 1
      %p66 = por %p64, %p65
      %p68 = scmp.ne.s32.totalorder %s53, %s67
      %p69 = scmp.eq.s32.totalorder %s22, 0
      %p70 = por %p68, %p69
      %s72 = sadd.s32 %s71, 1
      %p75 = scmp.eq.s32.totalorder %s16, 1
      %p76 = scmp.ne.s32.totalorder %s71, %s73
      %p77 = scmp.eq.s32.totalorder %s16, 0
      %p78 = por %p76, %p77
      %p79 = scmp.ne.s32.totalorder %s71, %s73
      %p80 = scmp.eq.s32.totalorder %s21, 1
      %p81 = por %p79, %p80
      %p82 = scmp.ne.s32.totalorder %s73, %s74
      %p83 = scmp.eq.s32.totalorder %s21, 0
      %p84 = por %p82, %p83
      %p85 = scmp.ne.s32.totalorder %s73, %s74
      %p86 = scmp.eq.s32.totalorder %s22, 1
      %p87 = por %p85, %p86
      %p89 = scmp.ne.s32.totalorder %s74, %s88
      %p90 = scmp.eq.s32.totalorder %s22, 0
      %p91 = por %p89, %p90
      %s93 = sadd.s32 %s92, 1
      %p96 = scmp.eq.s32.totalorder %s16, 1
      %p97 = scmp.ne.s32.totalorder %s92, %s94
      %p98 = scmp.eq.s32.totalorder %s16, 0
      %p99 = por %p97, %p98
      %p100 = scmp.ne.s32.totalorder %s92, %s94
      %p101 = scmp.eq.s32.totalorder %s21, 1
      %p102 = por %p100, %p101
      %p103 = scmp.ne.s32.totalorder %s94, %s95
      %p104 = scmp.eq.s32.totalorder %s21, 0
      %p105 = por %p103, %p104
      %p106 = scmp.ne.s32.totalorder %s94, %s95
      %p107 = scmp.eq.s32.totalorder %s22, 1
      %p108 = por %p106, %p107
      %p110 = scmp.ne.s32.totalorder %s95, %s109
      %p111 = scmp.eq.s32.totalorder %s22, 0
      %p112 = por %p110, %p111
      %s114 = sadd.s32 %s113, 1
      %p117 = scmp.eq.s32.totalorder %s16, 1
      %p118 = scmp.ne.s32.totalorder %s113, %s115
      %p119 = scmp.eq.s32.totalorder %s16, 0
      %p120 = por %p118, %p119
      %p121 = scmp.ne.s32.totalorder %s113, %s115
      %p122 = scmp.eq.s32.totalorder %s21, 1
      %p123 = por %p121, %p122
      %p124 = scmp.ne.s32.totalorder %s115, %s116
      %p125 = scmp.eq.s32.totalorder %s21, 0
      %p126 = por %p124, %p125
      %p127 = scmp.ne.s32.totalorder %s115, %s116
      %p128 = scmp.eq.s32.totalorder %s22, 1
      %p129 = por %p127, %p128
      %p131 = scmp.ne.s32.totalorder %s116, %s130
      %p132 = scmp.eq.s32.totalorder %s22, 0
      %p133 = por %p131, %p132
      %s135 = sadd.s32 %s134, 1
      %p138 = scmp.eq.s32.totalorder %s16, 1
      %p139 = scmp.ne.s32.totalorder %s134, %s136
      %p140 = scmp.eq.s32.totalorder %s16, 0
      %p141 = por %p139, %p140
      %p142 = scmp.ne.s32.totalorder %s134, %s136
      %p143 = scmp.eq.s32.totalorder %s21, 1
      %p144 = por %p142, %p143
      %p145 = scmp.ne.s32.totalorder %s136, %s137
      %p146 = scmp.eq.s32.totalorder %s21, 0
      %p147 = por %p145, %p146
      %p148 = scmp.ne.s32.totalorder %s136, %s137
      %p149 = scmp.eq.s32.totalorder %s22, 1
      %p150 = por %p148, %p149
      %p152 = scmp.ne.s32.totalorder %s137, %s151
      %p153 = scmp.eq.s32.totalorder %s22, 0
      %p154 = por %p152, %p153
      %s156 = sadd.s32 %s155, 1
      %p159 = scmp.eq.s32.totalorder %s16, 1
      %p160 = scmp.ne.s32.totalorder %s155, %s157
      %p161 = scmp.eq.s32.totalorder %s16, 0
      %p162 = por %p160, %p161
      %p163 = scmp.ne.s32.totalorder %s155, %s157
      %p164 = scmp.eq.s32.totalorder %s21, 1
      %p165 = por %p163, %p164
      %p166 = scmp.ne.s32.totalorder %s157, %s158
      %p167 = scmp.eq.s32.totalorder %s21, 0
      %p168 = por %p166, %p167
      %p169 = scmp.ne.s32.totalorder %s157, %s158
      %p170 = scmp.eq.s32.totalorder %s22, 1
      %p171 = por %p169, %p170
      %p173 = scmp.ne.s32.totalorder %s158, %s172
      %p174 = scmp.eq.s32.totalorder %s22, 0
      %p175 = por %p173, %p174
      %s176 = ssub.s32 %s16, %s23
      %p177 = scmp.eq.s32.totalorder %s176, 0
      %s179 = sadd.s32 %s178, 1
      %s180 = scalar_select %p177, %s178, %s179
      %p183 = pneg %p177
      %p184 = scmp.eq.s32.totalorder %s16, 1
      %p185 = por %p183, %p184
      %p186 = scmp.ne.s32.totalorder %s178, %s181
      %p187 = scmp.eq.s32.totalorder %s16, 0
      %p188 = por %p186, %p187
      %p189 = scmp.ne.s32.totalorder %s178, %s181
      %p190 = scmp.eq.s32.totalorder %s21, 1
      %p191 = por %p189, %p190
      %p192 = scmp.ne.s32.totalorder %s181, %s182
      %p193 = scmp.eq.s32.totalorder %s21, 0
      %p194 = por %p192, %p193
      %p195 = scmp.ne.s32.totalorder %s181, %s182
      %p196 = scmp.eq.s32.totalorder %s22, 1
      %p197 = por %p195, %p196
      %p199 = scmp.ne.s32.totalorder %s182, %s198
      %p200 = scmp.eq.s32.totalorder %s22, 0
      %p201 = por %p199, %p200
      %p202 = scmp.le.s32.totalorder 1, %s16
      %p203 = scmp.lt.s32.totalorder %s16, 3
      %p204 = pnand %p202, %p203
      %p205 = pneg %p204
      // Predicated region
      $region9: #{tpu_custom_call.1} parent=5 // pred_check
        _
      $region10: #{tpu_custom_call.1} parent=5 // pred_check_branch
        %207 = sbr.rel (%p204) target = $region12
      $region11: #{tpu_custom_call.1} parent=5 // pred_region
        %s208 = ssub.s32 %s16, 1
        // Predicated region
        $region13: #{tpu_custom_call.1} parent=11 // pred_check
          %p209 = pneg %p63
        $region14: #{tpu_custom_call.1} parent=11 // pred_check_branch
          %211 = sbr.rel (%p209) target = $region16
        $region15: #{tpu_custom_call.1} parent=11 // pred_region
          _
        $region16: #{tpu_custom_call.1} parent=11 // pred_fallthru
          _
        // Predicated region
        $region17: #{tpu_custom_call.1} parent=11 // pred_check
          %p212 = pneg %p84
        $region18: #{tpu_custom_call.1} parent=11 // pred_check_branch
          %214 = sbr.rel (%p212) target = $region20
        $region19: #{tpu_custom_call.1} parent=11 // pred_region
          _
        $region20: #{tpu_custom_call.1} parent=11 // pred_fallthru
          _
        // Predicated region
        $region21: #{tpu_custom_call.1} parent=11 // pred_check
          %p215 = pneg %p105
        $region22: #{tpu_custom_call.1} parent=11 // pred_check_branch
          %217 = sbr.rel (%p215) target = $region24
        $region23: #{tpu_custom_call.1} parent=11 // pred_region
          _
        $region24: #{tpu_custom_call.1} parent=11 // pred_fallthru
          _
        // Predicated region
        $region25: #{tpu_custom_call.1} parent=11 // pred_check
          %p218 = pneg %p126
        $region26: #{tpu_custom_call.1} parent=11 // pred_check_branch
          %220 = sbr.rel (%p218) target = $region28
        $region27: #{tpu_custom_call.1} parent=11 // pred_region
          _
        $region28: #{tpu_custom_call.1} parent=11 // pred_fallthru
          _
        // Predicated region
        $region29: #{tpu_custom_call.1} parent=11 // pred_check
          %p221 = pneg %p147
        $region30: #{tpu_custom_call.1} parent=11 // pred_check_branch
          %223 = sbr.rel (%p221) target = $region32
        $region31: #{tpu_custom_call.1} parent=11 // pred_region
          _
        $region32: #{tpu_custom_call.1} parent=11 // pred_fallthru
          _
        // Predicated region
        $region33: #{tpu_custom_call.1} parent=11 // pred_check
          %p224 = pneg %p168
        $region34: #{tpu_custom_call.1} parent=11 // pred_check_branch
          %226 = sbr.rel (%p224) target = $region36
        $region35: #{tpu_custom_call.1} parent=11 // pred_region
          _
        $region36: #{tpu_custom_call.1} parent=11 // pred_fallthru
          _
      $region12: #{tpu_custom_call.1} parent=5 // pred_fallthru
        _
      %p227 = scmp.lt.s32.totalorder %s16, 2
      // Predicated region
      $region37: #{tpu_custom_call.1} parent=5 // pred_check
        %p228 = pneg %p227
      $region38: #{tpu_custom_call.1} parent=5 // pred_check_branch
        %230 = sbr.rel (%p228) target = $region40
      $region39: #{tpu_custom_call.1} parent=5 // pred_region
        // Predicated region
        $region41: #{tpu_custom_call.1} parent=39 // pred_check
          %p231 = pneg %p36
        $region42: #{tpu_custom_call.1} parent=39 // pred_check_branch
          %233 = sbr.rel (%p231) target = $region44
        $region43: #{tpu_custom_call.1} parent=39 // pred_region
          %p234 = scmp.lt.s32.totalorder %s16, 1
          %s235 = scalar_select %p234, %s16, 1
          %s236 = smul.addr %s235, 8
          %s237 = smul.addr %s236, 8
          %s238 = scalar_lea.vmem %s0, %s237
        $region44: #{tpu_custom_call.1} parent=39 // pred_fallthru
          _
      $region40: #{tpu_custom_call.1} parent=5 // pred_fallthru
        _
      %p239 = scmp.le.s32.totalorder 1, %s16
      %p240 = scmp.lt.s32.totalorder %s16, 3
      %p241 = pnand %p239, %p240
      %p242 = pneg %p241
      // Predicated region
      $region45: #{tpu_custom_call.1} parent=5 // pred_check
        _
      $region46: #{tpu_custom_call.1} parent=5 // pred_check_branch
        %244 = sbr.rel (%p241) target = $region48
      $region47: #{tpu_custom_call.1} parent=5 // pred_region
        %s245 = ssub.s32 %s16, 1
        %p246 = scmp.lt.s32.totalorder %s21, 1
        %s247 = scalar_select %p246, %s21, 1
        %s248 = smul.addr %s247, 8
        %s249 = smul.addr %s248, 8
        %s250 = scalar_lea.vmem %s0, %s249
        %p251 = pneg %p42
        %p252 = pneg %p39
        %p253 = pneg %p63
        %p254 = pneg %p60
        %p255 = pneg %p84
        %p256 = pneg %p81
        %p257 = pneg %p105
        %p258 = pneg %p102
        %p259 = pneg %p126
        %p260 = pneg %p123
        %p261 = pneg %p147
        %p262 = pneg %p144
        %p263 = pneg %p168
        %p264 = pneg %p165
        %p265 = pneg %p194
        %p266 = pneg %p191
        %s267 = sand.u32 %s181, 1
        %s268 = scalar_lea.sflag [#allocation3], %s267
        %s269 = sand.u32 %s181, 1
        %s270 = smul.addr %s269, 8
        %s271 = scalar_lea.vmem [#allocation2], %s270
        %p272 = scmp.lt.s32.totalorder %s21, 1
        %s273 = scalar_select %p272, %s21, 1
        %s274 = smul.addr %s273, 8
        %s275 = smul.addr %s274, 8
        %s276 = scalar_lea.vmem %s0, %s275
        %v277 = vlaneseq
        %v278 = vand.u32 %v277, 127
        %vm279 = vcmp.ge.s32.totalorder %v278, 64
        %vm280 = vcmp.lt.s32.totalorder %v278, 96
        %vm281 = vmand %vm279, %vm280
        %v282 = vsel %vm281, 2.0, 1.0
        %v283 = vsel %vm281, -1.0, 0.0
        %v284 = vlaneseq
        %v285 = vshrl.u32 %v284, 7
        %vm286 = vcmp.eq.s32.totalorder %v285, 0
        %v287 = vsel %vm286, 1, 0
        %v288 = vcvt.s32.f32 %v287
        %vm289 = vcmp.eq.s32.totalorder %v285, 1
        %v290 = vsel %vm289, 1, 0
        %v291 = vcvt.s32.f32 %v290
        %vm292 = vcmp.eq.s32.totalorder %v285, 2
        %v293 = vsel %vm292, 1, 0
        %v294 = vcvt.s32.f32 %v293
        %vm295 = vcmp.eq.s32.totalorder %v285, 3
        %v296 = vsel %vm295, 1, 0
        %v297 = vcvt.s32.f32 %v296
        %vm298 = vcmp.eq.s32.totalorder %v285, 4
        %v299 = vsel %vm298, 1, 0
        %v300 = vcvt.s32.f32 %v299
        %vm301 = vcmp.eq.s32.totalorder %v285, 5
        %v302 = vsel %vm301, 1, 0
        %v303 = vcvt.s32.f32 %v302
        %vm304 = vcmp.eq.s32.totalorder %v285, 6
        %v305 = vsel %vm304, 1, 0
        %v306 = vcvt.s32.f32 %v305
        %vm307 = vcmp.eq.s32.totalorder %v285, 7
        %v308 = vsel %vm307, 1, 0
        %v309 = vcvt.s32.f32 %v308
        %v310 = vld [vmem:[%s276] sm:$0xff]
        %v311 = vld [vmem:[%s276 + $0x8] sm:$0xff]
        %v312 = vld [vmem:[%s276 + $0x10] sm:$0xff]
        %v313 = vld [vmem:[%s276 + $0x18] sm:$0xff]
        %v314 = vld [vmem:[%s276 + $0x20] sm:$0xff]
        %v315 = vld [vmem:[%s276 + $0x28] sm:$0xff]
        %v316 = vld [vmem:[%s276 + $0x30] sm:$0xff]
        %v317 = vld [vmem:[%s276 + $0x38] sm:$0xff]
        %v318 = vld [vmem:[%s1] sm:$0x1]
        %320 = vset.pattern.permute.xlu0 0
        %321 = vperm.xlu0 %320, %v310
        %v322 = vpop.permute.xlu0 %321
        %325 = vset.pattern.permute.xlu0 0
        %326 = vperm.xlu0 %325, %v311
        %v327 = vpop.permute.xlu0 %326
        %330 = vset.pattern.permute.xlu0 0
        %331 = vperm.xlu0 %330, %v312
        %v332 = vpop.permute.xlu0 %331
        %335 = vset.pattern.permute.xlu0 0
        %336 = vperm.xlu0 %335, %v313
        %v337 = vpop.permute.xlu0 %336
        %340 = vset.pattern.permute.xlu0 0
        %341 = vperm.xlu0 %340, %v314
        %v342 = vpop.permute.xlu0 %341
        %345 = vset.pattern.permute.xlu0 0
        %346 = vperm.xlu0 %345, %v315
        %v347 = vpop.permute.xlu0 %346
        %350 = vset.pattern.permute.xlu0 0
        %351 = vperm.xlu0 %350, %v316
        %v352 = vpop.permute.xlu0 %351
        %355 = vset.pattern.permute.xlu0 0
        %356 = vperm.xlu0 %355, %v317
        %v357 = vpop.permute.xlu0 %356
        %v360 = vlaneseq
        %v361 = vshrl.u32 %v360, 7
        %v362 = vsub.s32 0, %v361
        %v363 = vrot.slane %v318, %v362
        %v365 = vmul.f32 %v322, %v363
        %v366 = vmul.f32 %v327, %v363
        %v367 = vmul.f32 %v332, %v363
        %v368 = vmul.f32 %v337, %v363
        %v369 = vmul.f32 %v342, %v363
        %v370 = vmul.f32 %v347, %v363
        %v371 = vmul.f32 %v352, %v363
        %v372 = vmul.f32 %v357, %v363
        %v373 = vld [vmem:[%s4] sm:$0x1]
        %v375 = vlaneseq
        %v376 = vshrl.u32 %v375, 7
        %v377 = vsub.s32 0, %v376
        %v378 = vrot.slane %v373, %v377
        %v380 = vadd.f32 %v365, %v378
        %v381 = vadd.f32 %v366, %v378
        %v382 = vadd.f32 %v367, %v378
        %v383 = vadd.f32 %v368, %v378
        %v384 = vadd.f32 %v369, %v378
        %v385 = vadd.f32 %v370, %v378
        %v386 = vadd.f32 %v371, %v378
        %v387 = vadd.f32 %v372, %v378
        %v388 = vld [vmem:[%s3] sm:$0xff]
        %v389 = vld [vmem:[%s3 + $0x8] sm:$0xff]
        %v390 = vld [vmem:[%s3 + $0x10] sm:$0xff]
        %v391 = vld [vmem:[%s3 + $0x18] sm:$0xff]
        %vm392 = vcmask 261120
        %v394 = vsel %vm392, 0.0, 0
        %396 = vmatprep.subr.mxu0 0.0
        %397 = vmatpush1.msra.mxu0 %v388
        %398 = vmatprep.subr.mxu0 0.0
        %399 = vmatpush1.msra.mxu0 %v389
        %400 = vmatprep.subr.mxu0 0.0
        %401 = vmatpush1.msra.mxu0 %v390
        %402 = vmatprep.subr.mxu0 0.0
        %403 = vmatpush1.msra.mxu0 %v391
        %404 = vmatprep.subr.mxu0 0.0
        %405 = vmatpush1.msra.mxu0 0.0
        %406 = vmatprep.subr.mxu0 0.0
        %407 = vmatpush1.msra.mxu0 0.0
        %408 = vmatprep.subr.mxu0 0.0
        %409 = vmatpush1.msra.mxu0 0.0
        %410 = vmatprep.subr.mxu0 0.0
        %411 = vmatpush1.msra.mxu0 0.0
        %412 = vmatprep.subr.mxu0 0.0
        %413 = vmatpush1.msra.mxu0 0.0
        %414 = vmatprep.subr.mxu0 0.0
        %415 = vmatpush1.msra.mxu0 0.0
        %416 = vmatprep.subr.mxu0 0.0
        %417 = vmatpush1.msra.mxu0 0.0
        %418 = vmatprep.subr.mxu0 0.0
        %419 = vmatpush1.msra.mxu0 0.0
        %420 = vmatprep.subr.mxu0 0.0
        %421 = vmatpush1.msra.mxu0 0.0
        %422 = vmatprep.subr.mxu0 0.0
        %423 = vmatpush1.msra.mxu0 0.0
        %424 = vmatprep.subr.mxu0 0.0
        %425 = vmatpush1.msra.mxu0 0.0
        %426 = vmatprep.subr.mxu0 0.0
        %427 = vmatpush1.msra.mxu0 0.0
        %428 = vmatprep.subr.mxu0 0.0
        %429 = vmatpush1.msra.mxu0 0.0
        %430 = vmatprep.subr.mxu0 0.0
        %431 = vmatpush1.msra.mxu0 0.0
        %432 = vmatprep.subr.mxu0 0.0
        %433 = vmatpush1.msra.mxu0 0.0
        %434 = vmatprep.subr.mxu0 0.0
        %435 = vmatpush1.msra.mxu0 0.0
        %436 = vmatprep.subr.mxu0 0.0
        %437 = vmatpush1.msra.mxu0 0.0
        %438 = vmatprep.subr.mxu0 0.0
        %439 = vmatpush1.msra.mxu0 0.0
        %440 = vmatprep.subr.mxu0 0.0
        %441 = vmatpush1.msra.mxu0 0.0
        %442 = vmatprep.subr.mxu0 0.0
        %443 = vmatpush1.msra.mxu0 0.0
        %444 = vmatprep.subr.mxu0 0.0
        %445 = vmatpush1.msra.mxu0 0.0
        %446 = vmatprep.subr.mxu0 0.0
        %447 = vmatpush1.msra.mxu0 0.0
        %448 = vmatprep.subr.mxu0 0.0
        %449 = vmatpush1.msra.mxu0 0.0
        %450 = vmatprep.subr.mxu0 0.0
        %451 = vmatpush1.msra.mxu0 0.0
        %452 = vmatprep.subr.mxu0 0.0
        %453 = vmatpush1.msra.mxu0 0.0
        %454 = vmatprep.subr.mxu0 0.0
        %455 = vmatpush1.msra.mxu0 0.0
        %456 = vmatprep.subr.mxu0 0.0
        %457 = vmatpush1.msra.mxu0 0.0
        %458 = vmatprep.subr.mxu0 0.0
        %459 = vmatpush1.msra.mxu0 0.0
        %460 = vmatprep.mubr.f32.mxu0 0.0
        %461 = vmatmul.mubr.f32.gmra.mrb[0].mxu0 %v394
        %v462 = vpop.f32.mrb[0].mxu0
        %v463 = vadd.f32 0.0, %v462
        %v464 = vpop.f32.mrb[0].mxu0
        %465 = vdwg.mxu0
        %v466 = vadd.f32 %v380, %v463
        %v467 = vmul.f32 %v466, %v282
        %v468 = vxor.u32 %v467, 2147483648
        %v469 = vmul.f32 %v468, 1.442695
        %v470 = vpow.pop %v469
        %v471 = vadd.f32 %v470, 1.0
        %v472 = vrcp.pop %v471
        %v473 = vmul.f32 1.0, %v472
        %v474 = vmul.f32 %v473, %v282
        %v475 = vadd.f32 %v474, %v283
        %v476 = vmul.f32 %v475, 0.0
        %478 = vrot.lane.b32.xlu0 %v475, 64
        %v479 = vpop.permute.xlu0 %478
        %v481 = vmul.f32 %v475, %v479
        %483 = vrot.lane.b32.xlu0 %v481, 32
        %v484 = vpop.permute.xlu0 %483
        %v486 = vadd.f32 %v476, %v484
        %v487 = vtanh.pop %v486
        %489 = vrot.lane.b32.xlu0 %v487, 64
        %v490 = vpop.permute.xlu0 %489
        %v492 = vmul.f32 %v475, %v490
        %494 = vrot.lane.b32.xlu0 %v492, 32
        %v495 = vpop.permute.xlu0 %494
        %v496 = vsel %vm392, %v495, 0
        %498 = vmatprep.subr.mxu0 0.0
        %499 = vmatpush1.msra.mxu0 %v388
        %500 = vmatprep.subr.mxu0 0.0
        %501 = vmatpush1.msra.mxu0 %v389
        %502 = vmatprep.subr.mxu0 0.0
        %503 = vmatpush1.msra.mxu0 %v390
        %504 = vmatprep.subr.mxu0 0.0
        %505 = vmatpush1.msra.mxu0 %v391
        %506 = vmatprep.subr.mxu0 0.0
        %507 = vmatpush1.msra.mxu0 0.0
        %508 = vmatprep.subr.mxu0 0.0
        %509 = vmatpush1.msra.mxu0 0.0
        %510 = vmatprep.subr.mxu0 0.0
        %511 = vmatpush1.msra.mxu0 0.0
        %512 = vmatprep.subr.mxu0 0.0
        %513 = vmatpush1.msra.mxu0 0.0
        %514 = vmatprep.subr.mxu0 0.0
        %515 = vmatpush1.msra.mxu0 0.0
        %516 = vmatprep.subr.mxu0 0.0
        %517 = vmatpush1.msra.mxu0 0.0
        %518 = vmatprep.subr.mxu0 0.0
        %519 = vmatpush1.msra.mxu0 0.0
        %520 = vmatprep.subr.mxu0 0.0
        %521 = vmatpush1.msra.mxu0 0.0
        %522 = vmatprep.subr.mxu0 0.0
        %523 = vmatpush1.msra.mxu0 0.0
        %524 = vmatprep.subr.mxu0 0.0
        %525 = vmatpush1.msra.mxu0 0.0
        %526 = vmatprep.subr.mxu0 0.0
        %527 = vmatpush1.msra.mxu0 0.0
        %528 = vmatprep.subr.mxu0 0.0
        %529 = vmatpush1.msra.mxu0 0.0
        %530 = vmatprep.subr.mxu0 0.0
        %531 = vmatpush1.msra.mxu0 0.0
        %532 = vmatprep.subr.mxu0 0.0
        %533 = vmatpush1.msra.mxu0 0.0
        %534 = vmatprep.subr.mxu0 0.0
        %535 = vmatpush1.msra.mxu0 0.0
        %536 = vmatprep.subr.mxu0 0.0
        %537 = vmatpush1.msra.mxu0 0.0
        %538 = vmatprep.subr.mxu0 0.0
        %539 = vmatpush1.msra.mxu0 0.0
        %540 = vmatprep.subr.mxu0 0.0
        %541 = vmatpush1.msra.mxu0 0.0
        %542 = vmatprep.subr.mxu0 0.0
        %543 = vmatpush1.msra.mxu0 0.0
        %544 = vmatprep.subr.mxu0 0.0
        %545 = vmatpush1.msra.mxu0 0.0
        %546 = vmatprep.subr.mxu0 0.0
        %547 = vmatpush1.msra.mxu0 0.0
        %548 = vmatprep.subr.mxu0 0.0
        %549 = vmatpush1.msra.mxu0 0.0
        %550 = vmatprep.subr.mxu0 0.0
        %551 = vmatpush1.msra.mxu0 0.0
        %552 = vmatprep.subr.mxu0 0.0
        %553 = vmatpush1.msra.mxu0 0.0
        %554 = vmatprep.subr.mxu0 0.0
        %555 = vmatpush1.msra.mxu0 0.0
        %556 = vmatprep.subr.mxu0 0.0
        %557 = vmatpush1.msra.mxu0 0.0
        %558 = vmatprep.subr.mxu0 0.0
        %559 = vmatpush1.msra.mxu0 0.0
        %560 = vmatprep.subr.mxu0 0.0
        %561 = vmatpush1.msra.mxu0 0.0
        %562 = vmatprep.mubr.f32.mxu0 0.0
        %563 = vmatmul.mubr.f32.gmra.mrb[0].mxu0 %v496
        %v564 = vpop.f32.mrb[0].mxu0
        %v565 = vadd.f32 0.0, %v564
        %v566 = vpop.f32.mrb[0].mxu0
        %567 = vdwg.mxu0
        %v568 = vadd.f32 %v381, %v565
        %v569 = vmul.f32 %v568, %v282
        %v570 = vxor.u32 %v569, 2147483648
        %v571 = vmul.f32 %v570, 1.442695
        %v572 = vpow.pop %v571
        %v573 = vadd.f32 %v572, 1.0
        %v574 = vrcp.pop %v573
        %v575 = vmul.f32 1.0, %v574
        %v576 = vmul.f32 %v575, %v282
        %v577 = vadd.f32 %v576, %v283
        %v578 = vmul.f32 %v577, %v486
        %580 = vrot.lane.b32.xlu0 %v577, 64
        %v581 = vpop.permute.xlu0 %580
        %v583 = vmul.f32 %v577, %v581
        %585 = vrot.lane.b32.xlu0 %v583, 32
        %v586 = vpop.permute.xlu0 %585
        %v588 = vadd.f32 %v578, %v586
        %v589 = vtanh.pop %v588
        %591 = vrot.lane.b32.xlu0 %v589, 64
        %v592 = vpop.permute.xlu0 %591
        %v594 = vmul.f32 %v577, %v592
        %596 = vrot.lane.b32.xlu0 %v594, 32
        %v597 = vpop.permute.xlu0 %596
        %v598 = vsel %vm392, %v597, 0
        %600 = vmatprep.subr.mxu0 0.0
        %601 = vmatpush1.msra.mxu0 %v388
        %602 = vmatprep.subr.mxu0 0.0
        %603 = vmatpush1.msra.mxu0 %v389
        %604 = vmatprep.subr.mxu0 0.0
        %605 = vmatpush1.msra.mxu0 %v390
        %606 = vmatprep.subr.mxu0 0.0
        %607 = vmatpush1.msra.mxu0 %v391
        %608 = vmatprep.subr.mxu0 0.0
        %609 = vmatpush1.msra.mxu0 0.0
        %610 = vmatprep.subr.mxu0 0.0
        %611 = vmatpush1.msra.mxu0 0.0
        %612 = vmatprep.subr.mxu0 0.0
        %613 = vmatpush1.msra.mxu0 0.0
        %614 = vmatprep.subr.mxu0 0.0
        %615 = vmatpush1.msra.mxu0 0.0
        %616 = vmatprep.subr.mxu0 0.0
        %617 = vmatpush1.msra.mxu0 0.0
        %618 = vmatprep.subr.mxu0 0.0
        %619 = vmatpush1.msra.mxu0 0.0
        %620 = vmatprep.subr.mxu0 0.0
        %621 = vmatpush1.msra.mxu0 0.0
        %622 = vmatprep.subr.mxu0 0.0
        %623 = vmatpush1.msra.mxu0 0.0
        %624 = vmatprep.subr.mxu0 0.0
        %625 = vmatpush1.msra.mxu0 0.0
        %626 = vmatprep.subr.mxu0 0.0
        %627 = vmatpush1.msra.mxu0 0.0
        %628 = vmatprep.subr.mxu0 0.0
        %629 = vmatpush1.msra.mxu0 0.0
        %630 = vmatprep.subr.mxu0 0.0
        %631 = vmatpush1.msra.mxu0 0.0
        %632 = vmatprep.subr.mxu0 0.0
        %633 = vmatpush1.msra.mxu0 0.0
        %634 = vmatprep.subr.mxu0 0.0
        %635 = vmatpush1.msra.mxu0 0.0
        %636 = vmatprep.subr.mxu0 0.0
        %637 = vmatpush1.msra.mxu0 0.0
        %638 = vmatprep.subr.mxu0 0.0
        %639 = vmatpush1.msra.mxu0 0.0
        %640 = vmatprep.subr.mxu0 0.0
        %641 = vmatpush1.msra.mxu0 0.0
        %642 = vmatprep.subr.mxu0 0.0
        %643 = vmatpush1.msra.mxu0 0.0
        %644 = vmatprep.subr.mxu0 0.0
        %645 = vmatpush1.msra.mxu0 0.0
        %646 = vmatprep.subr.mxu0 0.0
        %647 = vmatpush1.msra.mxu0 0.0
        %648 = vmatprep.subr.mxu0 0.0
        %649 = vmatpush1.msra.mxu0 0.0
        %650 = vmatprep.subr.mxu0 0.0
        %651 = vmatpush1.msra.mxu0 0.0
        %652 = vmatprep.subr.mxu0 0.0
        %653 = vmatpush1.msra.mxu0 0.0
        %654 = vmatprep.subr.mxu0 0.0
        %655 = vmatpush1.msra.mxu0 0.0
        %656 = vmatprep.subr.mxu0 0.0
        %657 = vmatpush1.msra.mxu0 0.0
        %658 = vmatprep.subr.mxu0 0.0
        %659 = vmatpush1.msra.mxu0 0.0
        %660 = vmatprep.subr.mxu0 0.0
        %661 = vmatpush1.msra.mxu0 0.0
        %662 = vmatprep.subr.mxu0 0.0
        %663 = vmatpush1.msra.mxu0 0.0
        %664 = vmatprep.mubr.f32.mxu0 0.0
        %665 = vmatmul.mubr.f32.gmra.mrb[0].mxu0 %v598
        %v666 = vpop.f32.mrb[0].mxu0
        %v667 = vadd.f32 0.0, %v666
        %v668 = vpop.f32.mrb[0].mxu0
        %669 = vdwg.mxu0
        %v670 = vadd.f32 %v382, %v667
        %v671 = vmul.f32 %v670, %v282
        %v672 = vxor.u32 %v671, 2147483648
        %v673 = vmul.f32 %v672, 1.442695
        %v674 = vpow.pop %v673
        %v675 = vadd.f32 %v674, 1.0
        %v676 = vrcp.pop %v675
        %v677 = vmul.f32 1.0, %v676
        %v678 = vmul.f32 %v677, %v282
        %v679 = vadd.f32 %v678, %v283
        %v680 = vmul.f32 %v679, %v588
        %682 = vrot.lane.b32.xlu0 %v679, 64
        %v683 = vpop.permute.xlu0 %682
        %v685 = vmul.f32 %v679, %v683
        %687 = vrot.lane.b32.xlu0 %v685, 32
        %v688 = vpop.permute.xlu0 %687
        %v690 = vadd.f32 %v680, %v688
        %v691 = vtanh.pop %v690
        %693 = vrot.lane.b32.xlu0 %v691, 64
        %v694 = vpop.permute.xlu0 %693
        %v696 = vmul.f32 %v679, %v694
        %698 = vrot.lane.b32.xlu0 %v696, 32
        %v699 = vpop.permute.xlu0 %698
        %v700 = vsel %vm392, %v699, 0
        %702 = vmatprep.subr.mxu0 0.0
        %703 = vmatpush1.msra.mxu0 %v388
        %704 = vmatprep.subr.mxu0 0.0
        %705 = vmatpush1.msra.mxu0 %v389
        %706 = vmatprep.subr.mxu0 0.0
        %707 = vmatpush1.msra.mxu0 %v390
        %708 = vmatprep.subr.mxu0 0.0
        %709 = vmatpush1.msra.mxu0 %v391
        %710 = vmatprep.subr.mxu0 0.0
        %711 = vmatpush1.msra.mxu0 0.0
        %712 = vmatprep.subr.mxu0 0.0
        %713 = vmatpush1.msra.mxu0 0.0
        %714 = vmatprep.subr.mxu0 0.0
        %715 = vmatpush1.msra.mxu0 0.0
        %716 = vmatprep.subr.mxu0 0.0
        %717 = vmatpush1.msra.mxu0 0.0
        %718 = vmatprep.subr.mxu0 0.0
        %719 = vmatpush1.msra.mxu0 0.0
        %720 = vmatprep.subr.mxu0 0.0
        %721 = vmatpush1.msra.mxu0 0.0
        %722 = vmatprep.subr.mxu0 0.0
        %723 = vmatpush1.msra.mxu0 0.0
        %724 = vmatprep.subr.mxu0 0.0
        %725 = vmatpush1.msra.mxu0 0.0
        %726 = vmatprep.subr.mxu0 0.0
        %727 = vmatpush1.msra.mxu0 0.0
        %728 = vmatprep.subr.mxu0 0.0
        %729 = vmatpush1.msra.mxu0 0.0
        %730 = vmatprep.subr.mxu0 0.0
        %731 = vmatpush1.msra.mxu0 0.0
        %732 = vmatprep.subr.mxu0 0.0
        %733 = vmatpush1.msra.mxu0 0.0
        %734 = vmatprep.subr.mxu0 0.0
        %735 = vmatpush1.msra.mxu0 0.0
        %736 = vmatprep.subr.mxu0 0.0
        %737 = vmatpush1.msra.mxu0 0.0
        %738 = vmatprep.subr.mxu0 0.0
        %739 = vmatpush1.msra.mxu0 0.0
        %740 = vmatprep.subr.mxu0 0.0
        %741 = vmatpush1.msra.mxu0 0.0
        %742 = vmatprep.subr.mxu0 0.0
        %743 = vmatpush1.msra.mxu0 0.0
        %744 = vmatprep.subr.mxu0 0.0
        %745 = vmatpush1.msra.mxu0 0.0
        %746 = vmatprep.subr.mxu0 0.0
        %747 = vmatpush1.msra.mxu0 0.0
        %748 = vmatprep.subr.mxu0 0.0
        %749 = vmatpush1.msra.mxu0 0.0
        %750 = vmatprep.subr.mxu0 0.0
        %751 = vmatpush1.msra.mxu0 0.0
        %752 = vmatprep.subr.mxu0 0.0
        %753 = vmatpush1.msra.mxu0 0.0
        %754 = vmatprep.subr.mxu0 0.0
        %755 = vmatpush1.msra.mxu0 0.0
        %756 = vmatprep.subr.mxu0 0.0
        %757 = vmatpush1.msra.mxu0 0.0
        %758 = vmatprep.subr.mxu0 0.0
        %759 = vmatpush1.msra.mxu0 0.0
        %760 = vmatprep.subr.mxu0 0.0
        %761 = vmatpush1.msra.mxu0 0.0
        %762 = vmatprep.subr.mxu0 0.0
        %763 = vmatpush1.msra.mxu0 0.0
        %764 = vmatprep.subr.mxu0 0.0
        %765 = vmatpush1.msra.mxu0 0.0
        %766 = vmatprep.mubr.f32.mxu0 0.0
        %767 = vmatmul.mubr.f32.gmra.mrb[0].mxu0 %v700
        %v768 = vpop.f32.mrb[0].mxu0
        %v769 = vadd.f32 0.0, %v768
        %v770 = vpop.f32.mrb[0].mxu0
        %771 = vdwg.mxu0
        %v772 = vadd.f32 %v383, %v769
        %v773 = vmul.f32 %v772, %v282
        %v774 = vxor.u32 %v773, 2147483648
        %v775 = vmul.f32 %v774, 1.442695
        %v776 = vpow.pop %v775
        %v777 = vadd.f32 %v776, 1.0
        %v778 = vrcp.pop %v777
        %v779 = vmul.f32 1.0, %v778
        %v780 = vmul.f32 %v779, %v282
        %v781 = vadd.f32 %v780, %v283
        %v782 = vmul.f32 %v781, %v690
        %784 = vrot.lane.b32.xlu0 %v781, 64
        %v785 = vpop.permute.xlu0 %784
        %v787 = vmul.f32 %v781, %v785
        %789 = vrot.lane.b32.xlu0 %v787, 32
        %v790 = vpop.permute.xlu0 %789
        %v792 = vadd.f32 %v782, %v790
        %v793 = vtanh.pop %v792
        %795 = vrot.lane.b32.xlu0 %v793, 64
        %v796 = vpop.permute.xlu0 %795
        %v798 = vmul.f32 %v781, %v796
        %800 = vrot.lane.b32.xlu0 %v798, 32
        %v801 = vpop.permute.xlu0 %800
        %v802 = vsel %vm392, %v801, 0
        %804 = vmatprep.subr.mxu0 0.0
        %805 = vmatpush1.msra.mxu0 %v388
        %806 = vmatprep.subr.mxu0 0.0
        %807 = vmatpush1.msra.mxu0 %v389
        %808 = vmatprep.subr.mxu0 0.0
        %809 = vmatpush1.msra.mxu0 %v390
        %810 = vmatprep.subr.mxu0 0.0
        %811 = vmatpush1.msra.mxu0 %v391
        %812 = vmatprep.subr.mxu0 0.0
        %813 = vmatpush1.msra.mxu0 0.0
        %814 = vmatprep.subr.mxu0 0.0
        %815 = vmatpush1.msra.mxu0 0.0
        %816 = vmatprep.subr.mxu0 0.0
        %817 = vmatpush1.msra.mxu0 0.0
        %818 = vmatprep.subr.mxu0 0.0
        %819 = vmatpush1.msra.mxu0 0.0
        %820 = vmatprep.subr.mxu0 0.0
        %821 = vmatpush1.msra.mxu0 0.0
        %822 = vmatprep.subr.mxu0 0.0
        %823 = vmatpush1.msra.mxu0 0.0
        %824 = vmatprep.subr.mxu0 0.0
        %825 = vmatpush1.msra.mxu0 0.0
        %826 = vmatprep.subr.mxu0 0.0
        %827 = vmatpush1.msra.mxu0 0.0
        %828 = vmatprep.subr.mxu0 0.0
        %829 = vmatpush1.msra.mxu0 0.0
        %830 = vmatprep.subr.mxu0 0.0
        %831 = vmatpush1.msra.mxu0 0.0
        %832 = vmatprep.subr.mxu0 0.0
        %833 = vmatpush1.msra.mxu0 0.0
        %834 = vmatprep.subr.mxu0 0.0
        %835 = vmatpush1.msra.mxu0 0.0
        %836 = vmatprep.subr.mxu0 0.0
        %837 = vmatpush1.msra.mxu0 0.0
        %838 = vmatprep.subr.mxu0 0.0
        %839 = vmatpush1.msra.mxu0 0.0
        %840 = vmatprep.subr.mxu0 0.0
        %841 = vmatpush1.msra.mxu0 0.0
        %842 = vmatprep.subr.mxu0 0.0
        %843 = vmatpush1.msra.mxu0 0.0
        %844 = vmatprep.subr.mxu0 0.0
        %845 = vmatpush1.msra.mxu0 0.0
        %846 = vmatprep.subr.mxu0 0.0
        %847 = vmatpush1.msra.mxu0 0.0
        %848 = vmatprep.subr.mxu0 0.0
        %849 = vmatpush1.msra.mxu0 0.0
        %850 = vmatprep.subr.mxu0 0.0
        %851 = vmatpush1.msra.mxu0 0.0
        %852 = vmatprep.subr.mxu0 0.0
        %853 = vmatpush1.msra.mxu0 0.0
        %854 = vmatprep.subr.mxu0 0.0
        %855 = vmatpush1.msra.mxu0 0.0
        %856 = vmatprep.subr.mxu0 0.0
        %857 = vmatpush1.msra.mxu0 0.0
        %858 = vmatprep.subr.mxu0 0.0
        %859 = vmatpush1.msra.mxu0 0.0
        %860 = vmatprep.subr.mxu0 0.0
        %861 = vmatpush1.msra.mxu0 0.0
        %862 = vmatprep.subr.mxu0 0.0
        %863 = vmatpush1.msra.mxu0 0.0
        %864 = vmatprep.subr.mxu0 0.0
        %865 = vmatpush1.msra.mxu0 0.0
        %866 = vmatprep.subr.mxu0 0.0
        %867 = vmatpush1.msra.mxu0 0.0
        %868 = vmatprep.mubr.f32.mxu0 0.0
        %869 = vmatmul.mubr.f32.gmra.mrb[0].mxu0 %v802
        %v870 = vpop.f32.mrb[0].mxu0
        %v871 = vadd.f32 0.0, %v870
        %v872 = vpop.f32.mrb[0].mxu0
        %873 = vdwg.mxu0
        %v874 = vadd.f32 %v384, %v871
        %v875 = vmul.f32 %v874, %v282
        %v876 = vxor.u32 %v875, 2147483648
        %v877 = vmul.f32 %v876, 1.442695
        %v878 = vpow.pop %v877
        %v879 = vadd.f32 %v878, 1.0
        %v880 = vrcp.pop %v879
        %v881 = vmul.f32 1.0, %v880
        %v882 = vmul.f32 %v881, %v282
        %v883 = vadd.f32 %v882, %v283
        %v884 = vmul.f32 %v883, %v792
        %886 = vrot.lane.b32.xlu0 %v883, 64
        %v887 = vpop.permute.xlu0 %886
        %v889 = vmul.f32 %v883, %v887
        %891 = vrot.lane.b32.xlu0 %v889, 32
        %v892 = vpop.permute.xlu0 %891
        %v894 = vadd.f32 %v884, %v892
        %v895 = vtanh.pop %v894
        %897 = vrot.lane.b32.xlu0 %v895, 64
        %v898 = vpop.permute.xlu0 %897
        %v900 = vmul.f32 %v883, %v898
        %902 = vrot.lane.b32.xlu0 %v900, 32
        %v903 = vpop.permute.xlu0 %902
        %v904 = vsel %vm392, %v903, 0
        %906 = vmatprep.subr.mxu0 0.0
        %907 = vmatpush1.msra.mxu0 %v388
        %908 = vmatprep.subr.mxu0 0.0
        %909 = vmatpush1.msra.mxu0 %v389
        %910 = vmatprep.subr.mxu0 0.0
        %911 = vmatpush1.msra.mxu0 %v390
        %912 = vmatprep.subr.mxu0 0.0
        %913 = vmatpush1.msra.mxu0 %v391
        %914 = vmatprep.subr.mxu0 0.0
        %915 = vmatpush1.msra.mxu0 0.0
        %916 = vmatprep.subr.mxu0 0.0
        %917 = vmatpush1.msra.mxu0 0.0
        %918 = vmatprep.subr.mxu0 0.0
        %919 = vmatpush1.msra.mxu0 0.0
        %920 = vmatprep.subr.mxu0 0.0
        %921 = vmatpush1.msra.mxu0 0.0
        %922 = vmatprep.subr.mxu0 0.0
        %923 = vmatpush1.msra.mxu0 0.0
        %924 = vmatprep.subr.mxu0 0.0
        %925 = vmatpush1.msra.mxu0 0.0
        %926 = vmatprep.subr.mxu0 0.0
        %927 = vmatpush1.msra.mxu0 0.0
        %928 = vmatprep.subr.mxu0 0.0
        %929 = vmatpush1.msra.mxu0 0.0
        %930 = vmatprep.subr.mxu0 0.0
        %931 = vmatpush1.msra.mxu0 0.0
        %932 = vmatprep.subr.mxu0 0.0
        %933 = vmatpush1.msra.mxu0 0.0
        %934 = vmatprep.subr.mxu0 0.0
        %935 = vmatpush1.msra.mxu0 0.0
        %936 = vmatprep.subr.mxu0 0.0
        %937 = vmatpush1.msra.mxu0 0.0
        %938 = vmatprep.subr.mxu0 0.0
        %939 = vmatpush1.msra.mxu0 0.0
        %940 = vmatprep.subr.mxu0 0.0
        %941 = vmatpush1.msra.mxu0 0.0
        %942 = vmatprep.subr.mxu0 0.0
        %943 = vmatpush1.msra.mxu0 0.0
        %944 = vmatprep.subr.mxu0 0.0
        %945 = vmatpush1.msra.mxu0 0.0
        %946 = vmatprep.subr.mxu0 0.0
        %947 = vmatpush1.msra.mxu0 0.0
        %948 = vmatprep.subr.mxu0 0.0
        %949 = vmatpush1.msra.mxu0 0.0
        %950 = vmatprep.subr.mxu0 0.0
        %951 = vmatpush1.msra.mxu0 0.0
        %952 = vmatprep.subr.mxu0 0.0
        %953 = vmatpush1.msra.mxu0 0.0
        %954 = vmatprep.subr.mxu0 0.0
        %955 = vmatpush1.msra.mxu0 0.0
        %956 = vmatprep.subr.mxu0 0.0
        %957 = vmatpush1.msra.mxu0 0.0
        %958 = vmatprep.subr.mxu0 0.0
        %959 = vmatpush1.msra.mxu0 0.0
        %960 = vmatprep.subr.mxu0 0.0
        %961 = vmatpush1.msra.mxu0 0.0
        %962 = vmatprep.subr.mxu0 0.0
        %963 = vmatpush1.msra.mxu0 0.0
        %964 = vmatprep.subr.mxu0 0.0
        %965 = vmatpush1.msra.mxu0 0.0
        %966 = vmatprep.subr.mxu0 0.0
        %967 = vmatpush1.msra.mxu0 0.0
        %968 = vmatprep.subr.mxu0 0.0
        %969 = vmatpush1.msra.mxu0 0.0
        %970 = vmatprep.mubr.f32.mxu0 0.0
        %971 = vmatmul.mubr.f32.gmra.mrb[0].mxu0 %v904
        %v972 = vpop.f32.mrb[0].mxu0
        %v973 = vadd.f32 0.0, %v972
        %v974 = vpop.f32.mrb[0].mxu0
        %975 = vdwg.mxu0
        %v976 = vadd.f32 %v385, %v973
        %v977 = vmul.f32 %v976, %v282
        %v978 = vxor.u32 %v977, 2147483648
        %v979 = vmul.f32 %v978, 1.442695
        %v980 = vpow.pop %v979
        %v981 = vadd.f32 %v980, 1.0
        %v982 = vrcp.pop %v981
        %v983 = vmul.f32 1.0, %v982
        %v984 = vmul.f32 %v983, %v282
        %v985 = vadd.f32 %v984, %v283
        %v986 = vmul.f32 %v985, %v894
        %988 = vrot.lane.b32.xlu0 %v985, 64
        %v989 = vpop.permute.xlu0 %988
        %v991 = vmul.f32 %v985, %v989
        %993 = vrot.lane.b32.xlu0 %v991, 32
        %v994 = vpop.permute.xlu0 %993
        %v996 = vadd.f32 %v986, %v994
        %v997 = vtanh.pop %v996
        %999 = vrot.lane.b32.xlu0 %v997, 64
        %v1000 = vpop.permute.xlu0 %999
        %v1002 = vmul.f32 %v985, %v1000
        %1004 = vrot.lane.b32.xlu0 %v1002, 32
        %v1005 = vpop.permute.xlu0 %1004
        %v1006 = vsel %vm392, %v1005, 0
        %1008 = vmatprep.subr.mxu0 0.0
        %1009 = vmatpush1.msra.mxu0 %v388
        %1010 = vmatprep.subr.mxu0 0.0
        %1011 = vmatpush1.msra.mxu0 %v389
        %1012 = vmatprep.subr.mxu0 0.0
        %1013 = vmatpush1.msra.mxu0 %v390
        %1014 = vmatprep.subr.mxu0 0.0
        %1015 = vmatpush1.msra.mxu0 %v391
        %1016 = vmatprep.subr.mxu0 0.0
        %1017 = vmatpush1.msra.mxu0 0.0
        %1018 = vmatprep.subr.mxu0 0.0
        %1019 = vmatpush1.msra.mxu0 0.0
        %1020 = vmatprep.subr.mxu0 0.0
        %1021 = vmatpush1.msra.mxu0 0.0
        %1022 = vmatprep.subr.mxu0 0.0
        %1023 = vmatpush1.msra.mxu0 0.0
        %1024 = vmatprep.subr.mxu0 0.0
        %1025 = vmatpush1.msra.mxu0 0.0
        %1026 = vmatprep.subr.mxu0 0.0
        %1027 = vmatpush1.msra.mxu0 0.0
        %1028 = vmatprep.subr.mxu0 0.0
        %1029 = vmatpush1.msra.mxu0 0.0
        %1030 = vmatprep.subr.mxu0 0.0
        %1031 = vmatpush1.msra.mxu0 0.0
        %1032 = vmatprep.subr.mxu0 0.0
        %1033 = vmatpush1.msra.mxu0 0.0
        %1034 = vmatprep.subr.mxu0 0.0
        %1035 = vmatpush1.msra.mxu0 0.0
        %1036 = vmatprep.subr.mxu0 0.0
        %1037 = vmatpush1.msra.mxu0 0.0
        %1038 = vmatprep.subr.mxu0 0.0
        %1039 = vmatpush1.msra.mxu0 0.0
        %1040 = vmatprep.subr.mxu0 0.0
        %1041 = vmatpush1.msra.mxu0 0.0
        %1042 = vmatprep.subr.mxu0 0.0
        %1043 = vmatpush1.msra.mxu0 0.0
        %1044 = vmatprep.subr.mxu0 0.0
        %1045 = vmatpush1.msra.mxu0 0.0
        %1046 = vmatprep.subr.mxu0 0.0
        %1047 = vmatpush1.msra.mxu0 0.0
        %1048 = vmatprep.subr.mxu0 0.0
        %1049 = vmatpush1.msra.mxu0 0.0
        %1050 = vmatprep.subr.mxu0 0.0
        %1051 = vmatpush1.msra.mxu0 0.0
        %1052 = vmatprep.subr.mxu0 0.0
        %1053 = vmatpush1.msra.mxu0 0.0
        %1054 = vmatprep.subr.mxu0 0.0
        %1055 = vmatpush1.msra.mxu0 0.0
        %1056 = vmatprep.subr.mxu0 0.0
        %1057 = vmatpush1.msra.mxu0 0.0
        %1058 = vmatprep.subr.mxu0 0.0
        %1059 = vmatpush1.msra.mxu0 0.0
        %1060 = vmatprep.subr.mxu0 0.0
        %1061 = vmatpush1.msra.mxu0 0.0
        %1062 = vmatprep.subr.mxu0 0.0
        %1063 = vmatpush1.msra.mxu0 0.0
        %1064 = vmatprep.subr.mxu0 0.0
        %1065 = vmatpush1.msra.mxu0 0.0
        %1066 = vmatprep.subr.mxu0 0.0
        %1067 = vmatpush1.msra.mxu0 0.0
        %1068 = vmatprep.subr.mxu0 0.0
        %1069 = vmatpush1.msra.mxu0 0.0
        %1070 = vmatprep.subr.mxu0 0.0
        %1071 = vmatpush1.msra.mxu0 0.0
        %1072 = vmatprep.mubr.f32.mxu0 0.0
        %1073 = vmatmul.mubr.f32.gmra.mrb[0].mxu0 %v1006
        %v1074 = vpop.f32.mrb[0].mxu0
        %v1075 = vadd.f32 0.0, %v1074
        %v1076 = vpop.f32.mrb[0].mxu0
        %1077 = vdwg.mxu0
        %v1078 = vadd.f32 %v386, %v1075
        %v1079 = vmul.f32 %v1078, %v282
        %v1080 = vxor.u32 %v1079, 2147483648
        %v1081 = vmul.f32 %v1080, 1.442695
        %v1082 = vpow.pop %v1081
        %v1083 = vadd.f32 %v1082, 1.0
        %v1084 = vrcp.pop %v1083
        %v1085 = vmul.f32 1.0, %v1084
        %v1086 = vmul.f32 %v1085, %v282
        %v1087 = vadd.f32 %v1086, %v283
        %v1088 = vmul.f32 %v1087, %v996
        %1090 = vrot.lane.b32.xlu0 %v1087, 64
        %v1091 = vpop.permute.xlu0 %1090
        %v1093 = vmul.f32 %v1087, %v1091
        %1095 = vrot.lane.b32.xlu0 %v1093, 32
        %v1096 = vpop.permute.xlu0 %1095
        %v1098 = vadd.f32 %v1088, %v1096
        %v1099 = vtanh.pop %v1098
        %1101 = vrot.lane.b32.xlu0 %v1099, 64
        %v1102 = vpop.permute.xlu0 %1101
        %v1104 = vmul.f32 %v1087, %v1102
        %1106 = vrot.lane.b32.xlu0 %v1104, 32
        %v1107 = vpop.permute.xlu0 %1106
        %v1108 = vsel %vm392, %v1107, 0
        %1110 = vmatprep.subr.mxu0 0.0
        %1111 = vmatpush1.msra.mxu0 %v388
        %1112 = vmatprep.subr.mxu0 0.0
        %1113 = vmatpush1.msra.mxu0 %v389
        %1114 = vmatprep.subr.mxu0 0.0
        %1115 = vmatpush1.msra.mxu0 %v390
        %1116 = vmatprep.subr.mxu0 0.0
        %1117 = vmatpush1.msra.mxu0 %v391
        %1118 = vmatprep.subr.mxu0 0.0
        %1119 = vmatpush1.msra.mxu0 0.0
        %1120 = vmatprep.subr.mxu0 0.0
        %1121 = vmatpush1.msra.mxu0 0.0
        %1122 = vmatprep.subr.mxu0 0.0
        %1123 = vmatpush1.msra.mxu0 0.0
        %1124 = vmatprep.subr.mxu0 0.0
        %1125 = vmatpush1.msra.mxu0 0.0
        %1126 = vmatprep.subr.mxu0 0.0
        %1127 = vmatpush1.msra.mxu0 0.0
        %1128 = vmatprep.subr.mxu0 0.0
        %1129 = vmatpush1.msra.mxu0 0.0
        %1130 = vmatprep.subr.mxu0 0.0
        %1131 = vmatpush1.msra.mxu0 0.0
        %1132 = vmatprep.subr.mxu0 0.0
        %1133 = vmatpush1.msra.mxu0 0.0
        %1134 = vmatprep.subr.mxu0 0.0
        %1135 = vmatpush1.msra.mxu0 0.0
        %1136 = vmatprep.subr.mxu0 0.0
        %1137 = vmatpush1.msra.mxu0 0.0
        %1138 = vmatprep.subr.mxu0 0.0
        %1139 = vmatpush1.msra.mxu0 0.0
        %1140 = vmatprep.subr.mxu0 0.0
        %1141 = vmatpush1.msra.mxu0 0.0
        %1142 = vmatprep.subr.mxu0 0.0
        %1143 = vmatpush1.msra.mxu0 0.0
        %1144 = vmatprep.subr.mxu0 0.0
        %1145 = vmatpush1.msra.mxu0 0.0
        %1146 = vmatprep.subr.mxu0 0.0
        %1147 = vmatpush1.msra.mxu0 0.0
        %1148 = vmatprep.subr.mxu0 0.0
        %1149 = vmatpush1.msra.mxu0 0.0
        %1150 = vmatprep.subr.mxu0 0.0
        %1151 = vmatpush1.msra.mxu0 0.0
        %1152 = vmatprep.subr.mxu0 0.0
        %1153 = vmatpush1.msra.mxu0 0.0
        %1154 = vmatprep.subr.mxu0 0.0
        %1155 = vmatpush1.msra.mxu0 0.0
        %1156 = vmatprep.subr.mxu0 0.0
        %1157 = vmatpush1.msra.mxu0 0.0
        %1158 = vmatprep.subr.mxu0 0.0
        %1159 = vmatpush1.msra.mxu0 0.0
        %1160 = vmatprep.subr.mxu0 0.0
        %1161 = vmatpush1.msra.mxu0 0.0
        %1162 = vmatprep.subr.mxu0 0.0
        %1163 = vmatpush1.msra.mxu0 0.0
        %1164 = vmatprep.subr.mxu0 0.0
        %1165 = vmatpush1.msra.mxu0 0.0
        %1166 = vmatprep.subr.mxu0 0.0
        %1167 = vmatpush1.msra.mxu0 0.0
        %1168 = vmatprep.subr.mxu0 0.0
        %1169 = vmatpush1.msra.mxu0 0.0
        %1170 = vmatprep.subr.mxu0 0.0
        %1171 = vmatpush1.msra.mxu0 0.0
        %1172 = vmatprep.subr.mxu0 0.0
        %1173 = vmatpush1.msra.mxu0 0.0
        %1174 = vmatprep.mubr.f32.mxu0 0.0
        %1175 = vmatmul.mubr.f32.gmra.mrb[0].mxu0 %v1108
        %v1176 = vpop.f32.mrb[0].mxu0
        %v1177 = vadd.f32 0.0, %v1176
        %v1178 = vpop.f32.mrb[0].mxu0
        %1179 = vdwg.mxu0
        %v1180 = vadd.f32 %v387, %v1177
        %v1181 = vmul.f32 %v1180, %v282
        %v1182 = vxor.u32 %v1181, 2147483648
        %v1183 = vmul.f32 %v1182, 1.442695
        %v1184 = vpow.pop %v1183
        %v1185 = vadd.f32 %v1184, 1.0
        %v1186 = vrcp.pop %v1185
        %v1187 = vmul.f32 1.0, %v1186
        %v1188 = vmul.f32 %v1187, %v282
        %v1189 = vadd.f32 %v1188, %v283
        %v1190 = vmul.f32 %v1189, %v1098
        %1192 = vrot.lane.b32.xlu0 %v1189, 64
        %v1193 = vpop.permute.xlu0 %1192
        %v1195 = vmul.f32 %v1189, %v1193
        %1197 = vrot.lane.b32.xlu0 %v1195, 32
        %v1198 = vpop.permute.xlu0 %1197
        %v1200 = vadd.f32 %v1190, %v1198
        %v1201 = vtanh.pop %v1200
        %1203 = vrot.lane.b32.xlu0 %v1201, 64
        %v1204 = vpop.permute.xlu0 %1203
        %v1206 = vmul.f32 %v1189, %v1204
        %v1207 = vld [vmem:[%s2] sm:$0xff]
        %v1208 = vld [vmem:[%s2 + $0x8] sm:$0xff]
        %v1209 = vld [vmem:[%s2 + $0x10] sm:$0xff]
        %v1210 = vld [vmem:[%s2 + $0x18] sm:$0xff]
        %s1211 = scalar_lea.vmem %s4, 1
        %v1212 = vld [vmem:[%s1211] sm:$0x1]
        %v1214 = vlaneseq
        %v1215 = vshrl.u32 %v1214, 7
        %v1216 = vsub.s32 0, %v1215
        %v1217 = vrot.slane %v1212, %v1216
        %1220 = vrot.lane.b32.xlu0 %v1206, 32
        %v1221 = vpop.permute.xlu0 %1220
        %v1222 = vsel %vm392, %v1221, 0
        %1224 = vmatprep.subr.mxu0 0.0
        %1225 = vmatpush1.msra.mxu0 %v1207
        %1226 = vmatprep.subr.mxu0 0.0
        %1227 = vmatpush1.msra.mxu0 %v1208
        %1228 = vmatprep.subr.mxu0 0.0
        %1229 = vmatpush1.msra.mxu0 %v1209
        %1230 = vmatprep.subr.mxu0 0.0
        %1231 = vmatpush1.msra.mxu0 %v1210
        %1232 = vmatprep.subr.mxu0 0.0
        %1233 = vmatpush1.msra.mxu0 0.0
        %1234 = vmatprep.subr.mxu0 0.0
        %1235 = vmatpush1.msra.mxu0 0.0
        %1236 = vmatprep.subr.mxu0 0.0
        %1237 = vmatpush1.msra.mxu0 0.0
        %1238 = vmatprep.subr.mxu0 0.0
        %1239 = vmatpush1.msra.mxu0 0.0
        %1240 = vmatprep.subr.mxu0 0.0
        %1241 = vmatpush1.msra.mxu0 0.0
        %1242 = vmatprep.subr.mxu0 0.0
        %1243 = vmatpush1.msra.mxu0 0.0
        %1244 = vmatprep.subr.mxu0 0.0
        %1245 = vmatpush1.msra.mxu0 0.0
        %1246 = vmatprep.subr.mxu0 0.0
        %1247 = vmatpush1.msra.mxu0 0.0
        %1248 = vmatprep.subr.mxu0 0.0
        %1249 = vmatpush1.msra.mxu0 0.0
        %1250 = vmatprep.subr.mxu0 0.0
        %1251 = vmatpush1.msra.mxu0 0.0
        %1252 = vmatprep.subr.mxu0 0.0
        %1253 = vmatpush1.msra.mxu0 0.0
        %1254 = vmatprep.subr.mxu0 0.0
        %1255 = vmatpush1.msra.mxu0 0.0
        %1256 = vmatprep.subr.mxu0 0.0
        %1257 = vmatpush1.msra.mxu0 0.0
        %1258 = vmatprep.subr.mxu0 0.0
        %1259 = vmatpush1.msra.mxu0 0.0
        %1260 = vmatprep.subr.mxu0 0.0
        %1261 = vmatpush1.msra.mxu0 0.0
        %1262 = vmatprep.subr.mxu0 0.0
        %1263 = vmatpush1.msra.mxu0 0.0
        %1264 = vmatprep.subr.mxu0 0.0
        %1265 = vmatpush1.msra.mxu0 0.0
        %1266 = vmatprep.subr.mxu0 0.0
        %1267 = vmatpush1.msra.mxu0 0.0
        %1268 = vmatprep.subr.mxu0 0.0
        %1269 = vmatpush1.msra.mxu0 0.0
        %1270 = vmatprep.subr.mxu0 0.0
        %1271 = vmatpush1.msra.mxu0 0.0
        %1272 = vmatprep.subr.mxu0 0.0
        %1273 = vmatpush1.msra.mxu0 0.0
        %1274 = vmatprep.subr.mxu0 0.0
        %1275 = vmatpush1.msra.mxu0 0.0
        %1276 = vmatprep.subr.mxu0 0.0
        %1277 = vmatpush1.msra.mxu0 0.0
        %1278 = vmatprep.subr.mxu0 0.0
        %1279 = vmatpush1.msra.mxu0 0.0
        %1280 = vmatprep.subr.mxu0 0.0
        %1281 = vmatpush1.msra.mxu0 0.0
        %1282 = vmatprep.subr.mxu0 0.0
        %1283 = vmatpush1.msra.mxu0 0.0
        %1284 = vmatprep.subr.mxu0 0.0
        %1285 = vmatpush1.msra.mxu0 0.0
        %1286 = vmatprep.subr.mxu0 0.0
        %1287 = vmatpush1.msra.mxu0 0.0
        %1288 = vmatprep.mubr.f32.mxu0 0.0
        %1289 = vmatmul.mubr.f32.gmra.mrb[0].mxu0 %v496
        %v1290 = vpop.f32.mrb[0].mxu0
        %v1291 = vadd.f32 %v1217, %v1290
        %v1292 = vpop.f32.mrb[0].mxu0
        %1293 = vmatprep.mubr.f32.mxu0 0.0
        %1294 = vmatmul.mubr.f32.gmra.mrb[0].mxu0 %v598
        %v1295 = vpop.f32.mrb[0].mxu0
        %v1296 = vadd.f32 %v1217, %v1295
        %v1297 = vpop.f32.mrb[0].mxu0
        %1298 = vmatprep.mubr.f32.mxu0 0.0
        %1299 = vmatmul.mubr.f32.gmra.mrb[0].mxu0 %v700
        %v1300 = vpop.f32.mrb[0].mxu0
        %v1301 = vadd.f32 %v1217, %v1300
        %v1302 = vpop.f32.mrb[0].mxu0
        %1303 = vmatprep.mubr.f32.mxu0 0.0
        %1304 = vmatmul.mubr.f32.gmra.mrb[0].mxu0 %v802
        %v1305 = vpop.f32.mrb[0].mxu0
        %v1306 = vadd.f32 %v1217, %v1305
        %v1307 = vpop.f32.mrb[0].mxu0
        %1308 = vmatprep.mubr.f32.mxu0 0.0
        %1309 = vmatmul.mubr.f32.gmra.mrb[0].mxu0 %v904
        %v1310 = vpop.f32.mrb[0].mxu0
        %v1311 = vadd.f32 %v1217, %v1310
        %v1312 = vpop.f32.mrb[0].mxu0
        %1313 = vmatprep.mubr.f32.mxu0 0.0
        %1314 = vmatmul.mubr.f32.gmra.mrb[0].mxu0 %v1006
        %v1315 = vpop.f32.mrb[0].mxu0
        %v1316 = vadd.f32 %v1217, %v1315
        %v1317 = vpop.f32.mrb[0].mxu0
        %1318 = vmatprep.mubr.f32.mxu0 0.0
        %1319 = vmatmul.mubr.f32.gmra.mrb[0].mxu0 %v1108
        %v1320 = vpop.f32.mrb[0].mxu0
        %v1321 = vadd.f32 %v1217, %v1320
        %v1322 = vpop.f32.mrb[0].mxu0
        %1323 = vmatprep.mubr.f32.mxu0 0.0
        %1324 = vmatmul.mubr.f32.gmra.mrb[0].mxu0 %v1222
        %v1325 = vpop.f32.mrb[0].mxu0
        %v1326 = vadd.f32 %v1217, %v1325
        %v1327 = vpop.f32.mrb[0].mxu0
        %1328 = vdwg.mxu0
        %s1329 = scalar_lea.vmem %s3, 32
        %v1330 = vld [vmem:[%s1329] sm:$0xff]
        %v1331 = vld [vmem:[%s1329 + $0x8] sm:$0xff]
        %v1332 = vld [vmem:[%s1329 + $0x10] sm:$0xff]
        %v1333 = vld [vmem:[%s1329 + $0x18] sm:$0xff]
        %1334 = vmatprep.subr.mxu0 0.0
        %1335 = vmatpush1.msra.mxu0 %v1330
        %1336 = vmatprep.subr.mxu0 0.0
        %1337 = vmatpush1.msra.mxu0 %v1331
        %1338 = vmatprep.subr.mxu0 0.0
        %1339 = vmatpush1.msra.mxu0 %v1332
        %1340 = vmatprep.subr.mxu0 0.0
        %1341 = vmatpush1.msra.mxu0 %v1333
        %1342 = vmatprep.subr.mxu0 0.0
        %1343 = vmatpush1.msra.mxu0 0.0
        %1344 = vmatprep.subr.mxu0 0.0
        %1345 = vmatpush1.msra.mxu0 0.0
        %1346 = vmatprep.subr.mxu0 0.0
        %1347 = vmatpush1.msra.mxu0 0.0
        %1348 = vmatprep.subr.mxu0 0.0
        %1349 = vmatpush1.msra.mxu0 0.0
        %1350 = vmatprep.subr.mxu0 0.0
        %1351 = vmatpush1.msra.mxu0 0.0
        %1352 = vmatprep.subr.mxu0 0.0
        %1353 = vmatpush1.msra.mxu0 0.0
        %1354 = vmatprep.subr.mxu0 0.0
        %1355 = vmatpush1.msra.mxu0 0.0
        %1356 = vmatprep.subr.mxu0 0.0
        %1357 = vmatpush1.msra.mxu0 0.0
        %1358 = vmatprep.subr.mxu0 0.0
        %1359 = vmatpush1.msra.mxu0 0.0
        %1360 = vmatprep.subr.mxu0 0.0
        %1361 = vmatpush1.msra.mxu0 0.0
        %1362 = vmatprep.subr.mxu0 0.0
        %1363 = vmatpush1.msra.mxu0 0.0
        %1364 = vmatprep.subr.mxu0 0.0
        %1365 = vmatpush1.msra.mxu0 0.0
        %1366 = vmatprep.subr.mxu0 0.0
        %1367 = vmatpush1.msra.mxu0 0.0
        %1368 = vmatprep.subr.mxu0 0.0
        %1369 = vmatpush1.msra.mxu0 0.0
        %1370 = vmatprep.subr.mxu0 0.0
        %1371 = vmatpush1.msra.mxu0 0.0
        %1372 = vmatprep.subr.mxu0 0.0
        %1373 = vmatpush1.msra.mxu0 0.0
        %1374 = vmatprep.subr.mxu0 0.0
        %1375 = vmatpush1.msra.mxu0 0.0
        %1376 = vmatprep.subr.mxu0 0.0
        %1377 = vmatpush1.msra.mxu0 0.0
        %1378 = vmatprep.subr.mxu0 0.0
        %1379 = vmatpush1.msra.mxu0 0.0
        %1380 = vmatprep.subr.mxu0 0.0
        %1381 = vmatpush1.msra.mxu0 0.0
        %1382 = vmatprep.subr.mxu0 0.0
        %1383 = vmatpush1.msra.mxu0 0.0
        %1384 = vmatprep.subr.mxu0 0.0
        %1385 = vmatpush1.msra.mxu0 0.0
        %1386 = vmatprep.subr.mxu0 0.0
        %1387 = vmatpush1.msra.mxu0 0.0
        %1388 = vmatprep.subr.mxu0 0.0
        %1389 = vmatpush1.msra.mxu0 0.0
        %1390 = vmatprep.subr.mxu0 0.0
        %1391 = vmatpush1.msra.mxu0 0.0
        %1392 = vmatprep.subr.mxu0 0.0
        %1393 = vmatpush1.msra.mxu0 0.0
        %1394 = vmatprep.subr.mxu0 0.0
        %1395 = vmatpush1.msra.mxu0 0.0
        %1396 = vmatprep.subr.mxu0 0.0
        %1397 = vmatpush1.msra.mxu0 0.0
        %1398 = vmatprep.mubr.f32.mxu0 0.0
        %1399 = vmatmul.mubr.f32.gmra.mrb[0].mxu0 %v394
        %v1400 = vpop.f32.mrb[0].mxu0
        %v1401 = vadd.f32 0.0, %v1400
        %v1402 = vpop.f32.mrb[0].mxu0
        %1403 = vdwg.mxu0
        %v1404 = vadd.f32 %v1291, %v1401
        %v1405 = vmul.f32 %v1404, %v282
        %v1406 = vxor.u32 %v1405, 2147483648
        %v1407 = vmul.f32 %v1406, 1.442695
        %v1408 = vpow.pop %v1407
        %v1409 = vadd.f32 %v1408, 1.0
        %v1410 = vrcp.pop %v1409
        %v1411 = vmul.f32 1.0, %v1410
        %v1412 = vmul.f32 %v1411, %v282
        %v1413 = vadd.f32 %v1412, %v283
        %v1414 = vmul.f32 %v1413, 0.0
        %1416 = vrot.lane.b32.xlu0 %v1413, 64
        %v1417 = vpop.permute.xlu0 %1416
        %v1419 = vmul.f32 %v1413, %v1417
        %1421 = vrot.lane.b32.xlu0 %v1419, 32
        %v1422 = vpop.permute.xlu0 %1421
        %v1424 = vadd.f32 %v1414, %v1422
        %v1425 = vtanh.pop %v1424
        %1427 = vrot.lane.b32.xlu0 %v1425, 64
        %v1428 = vpop.permute.xlu0 %1427
        %v1430 = vmul.f32 %v1413, %v1428
        %v1431 = vlaneseq
        %v1432 = vshrl.u32 %v1431, 7
        %v1433 = vsub.s32 7, %v1432
        %v1434 = vrot.slane %v1430, %v1433
        %v1435 = vmul.f32 %v288, %v1434
        %v1436 = vadd.f32 %v1435, 0.0
        %1438 = vrot.lane.b32.xlu0 %v1430, 32
        %v1439 = vpop.permute.xlu0 %1438
        %v1440 = vsel %vm392, %v1439, 0
        %1442 = vmatprep.subr.mxu0 0.0
        %1443 = vmatpush1.msra.mxu0 %v1330
        %1444 = vmatprep.subr.mxu0 0.0
        %1445 = vmatpush1.msra.mxu0 %v1331
        %1446 = vmatprep.subr.mxu0 0.0
        %1447 = vmatpush1.msra.mxu0 %v1332
        %1448 = vmatprep.subr.mxu0 0.0
        %1449 = vmatpush1.msra.mxu0 %v1333
        %1450 = vmatprep.subr.mxu0 0.0
        %1451 = vmatpush1.msra.mxu0 0.0
        %1452 = vmatprep.subr.mxu0 0.0
        %1453 = vmatpush1.msra.mxu0 0.0
        %1454 = vmatprep.subr.mxu0 0.0
        %1455 = vmatpush1.msra.mxu0 0.0
        %1456 = vmatprep.subr.mxu0 0.0
        %1457 = vmatpush1.msra.mxu0 0.0
        %1458 = vmatprep.subr.mxu0 0.0
        %1459 = vmatpush1.msra.mxu0 0.0
        %1460 = vmatprep.subr.mxu0 0.0
        %1461 = vmatpush1.msra.mxu0 0.0
        %1462 = vmatprep.subr.mxu0 0.0
        %1463 = vmatpush1.msra.mxu0 0.0
        %1464 = vmatprep.subr.mxu0 0.0
        %1465 = vmatpush1.msra.mxu0 0.0
        %1466 = vmatprep.subr.mxu0 0.0
        %1467 = vmatpush1.msra.mxu0 0.0
        %1468 = vmatprep.subr.mxu0 0.0
        %1469 = vmatpush1.msra.mxu0 0.0
        %1470 = vmatprep.subr.mxu0 0.0
        %1471 = vmatpush1.msra.mxu0 0.0
        %1472 = vmatprep.subr.mxu0 0.0
        %1473 = vmatpush1.msra.mxu0 0.0
        %1474 = vmatprep.subr.mxu0 0.0
        %1475 = vmatpush1.msra.mxu0 0.0
        %1476 = vmatprep.subr.mxu0 0.0
        %1477 = vmatpush1.msra.mxu0 0.0
        %1478 = vmatprep.subr.mxu0 0.0
        %1479 = vmatpush1.msra.mxu0 0.0
        %1480 = vmatprep.subr.mxu0 0.0
        %1481 = vmatpush1.msra.mxu0 0.0
        %1482 = vmatprep.subr.mxu0 0.0
        %1483 = vmatpush1.msra.mxu0 0.0
        %1484 = vmatprep.subr.mxu0 0.0
        %1485 = vmatpush1.msra.mxu0 0.0
        %1486 = vmatprep.subr.mxu0 0.0
        %1487 = vmatpush1.msra.mxu0 0.0
        %1488 = vmatprep.subr.mxu0 0.0
        %1489 = vmatpush1.msra.mxu0 0.0
        %1490 = vmatprep.subr.mxu0 0.0
        %1491 = vmatpush1.msra.mxu0 0.0
        %1492 = vmatprep.subr.mxu0 0.0
        %1493 = vmatpush1.msra.mxu0 0.0
        %1494 = vmatprep.subr.mxu0 0.0
        %1495 = vmatpush1.msra.mxu0 0.0
        %1496 = vmatprep.subr.mxu0 0.0
        %1497 = vmatpush1.msra.mxu0 0.0
        %1498 = vmatprep.subr.mxu0 0.0
        %1499 = vmatpush1.msra.mxu0 0.0
        %1500 = vmatprep.subr.mxu0 0.0
        %1501 = vmatpush1.msra.mxu0 0.0
        %1502 = vmatprep.subr.mxu0 0.0
        %1503 = vmatpush1.msra.mxu0 0.0
        %1504 = vmatprep.subr.mxu0 0.0
        %1505 = vmatpush1.msra.mxu0 0.0
        %1506 = vmatprep.mubr.f32.mxu0 0.0
        %1507 = vmatmul.mubr.f32.gmra.mrb[0].mxu0 %v1440
        %v1508 = vpop.f32.mrb[0].mxu0
        %v1509 = vadd.f32 0.0, %v1508
        %v1510 = vpop.f32.mrb[0].mxu0
        %1511 = vdwg.mxu0
        %v1512 = vadd.f32 %v1296, %v1509
        %v1513 = vmul.f32 %v1512, %v282
        %v1514 = vxor.u32 %v1513, 2147483648
        %v1515 = vmul.f32 %v1514, 1.442695
        %v1516 = vpow.pop %v1515
        %v1517 = vadd.f32 %v1516, 1.0
        %v1518 = vrcp.pop %v1517
        %v1519 = vmul.f32 1.0, %v1518
        %v1520 = vmul.f32 %v1519, %v282
        %v1521 = vadd.f32 %v1520, %v283
        %v1522 = vmul.f32 %v1521, %v1424
        %1524 = vrot.lane.b32.xlu0 %v1521, 64
        %v1525 = vpop.permute.xlu0 %1524
        %v1527 = vmul.f32 %v1521, %v1525
        %1529 = vrot.lane.b32.xlu0 %v1527, 32
        %v1530 = vpop.permute.xlu0 %1529
        %v1532 = vadd.f32 %v1522, %v1530
        %v1533 = vtanh.pop %v1532
        %1535 = vrot.lane.b32.xlu0 %v1533, 64
        %v1536 = vpop.permute.xlu0 %1535
        %v1538 = vmul.f32 %v1521, %v1536
        %v1539 = vlaneseq
        %v1540 = vshrl.u32 %v1539, 7
        %v1541 = vsub.s32 7, %v1540
        %v1542 = vrot.slane %v1538, %v1541
        %v1543 = vmul.f32 %v291, %v1542
        %v1544 = vadd.f32 %v1436, %v1543
        %1546 = vrot.lane.b32.xlu0 %v1538, 32
        %v1547 = vpop.permute.xlu0 %1546
        %v1548 = vsel %vm392, %v1547, 0
        %1550 = vmatprep.subr.mxu0 0.0
        %1551 = vmatpush1.msra.mxu0 %v1330
        %1552 = vmatprep.subr.mxu0 0.0
        %1553 = vmatpush1.msra.mxu0 %v1331
        %1554 = vmatprep.subr.mxu0 0.0
        %1555 = vmatpush1.msra.mxu0 %v1332
        %1556 = vmatprep.subr.mxu0 0.0
        %1557 = vmatpush1.msra.mxu0 %v1333
        %1558 = vmatprep.subr.mxu0 0.0
        %1559 = vmatpush1.msra.mxu0 0.0
        %1560 = vmatprep.subr.mxu0 0.0
        %1561 = vmatpush1.msra.mxu0 0.0
        %1562 = vmatprep.subr.mxu0 0.0
        %1563 = vmatpush1.msra.mxu0 0.0
        %1564 = vmatprep.subr.mxu0 0.0
        %1565 = vmatpush1.msra.mxu0 0.0
        %1566 = vmatprep.subr.mxu0 0.0
        %1567 = vmatpush1.msra.mxu0 0.0
        %1568 = vmatprep.subr.mxu0 0.0
        %1569 = vmatpush1.msra.mxu0 0.0
        %1570 = vmatprep.subr.mxu0 0.0
        %1571 = vmatpush1.msra.mxu0 0.0
        %1572 = vmatprep.subr.mxu0 0.0
        %1573 = vmatpush1.msra.mxu0 0.0
        %1574 = vmatprep.subr.mxu0 0.0
        %1575 = vmatpush1.msra.mxu0 0.0
        %1576 = vmatprep.subr.mxu0 0.0
        %1577 = vmatpush1.msra.mxu0 0.0
        %1578 = vmatprep.subr.mxu0 0.0
        %1579 = vmatpush1.msra.mxu0 0.0
        %1580 = vmatprep.subr.mxu0 0.0
        %1581 = vmatpush1.msra.mxu0 0.0
        %1582 = vmatprep.subr.mxu0 0.0
        %1583 = vmatpush1.msra.mxu0 0.0
        %1584 = vmatprep.subr.mxu0 0.0
        %1585 = vmatpush1.msra.mxu0 0.0
        %1586 = vmatprep.subr.mxu0 0.0
        %1587 = vmatpush1.msra.mxu0 0.0
        %1588 = vmatprep.subr.mxu0 0.0
        %1589 = vmatpush1.msra.mxu0 0.0
        %1590 = vmatprep.subr.mxu0 0.0
        %1591 = vmatpush1.msra.mxu0 0.0
        %1592 = vmatprep.subr.mxu0 0.0
        %1593 = vmatpush1.msra.mxu0 0.0
        %1594 = vmatprep.subr.mxu0 0.0
        %1595 = vmatpush1.msra.mxu0 0.0
        %1596 = vmatprep.subr.mxu0 0.0
        %1597 = vmatpush1.msra.mxu0 0.0
        %1598 = vmatprep.subr.mxu0 0.0
        %1599 = vmatpush1.msra.mxu0 0.0
        %1600 = vmatprep.subr.mxu0 0.0
        %1601 = vmatpush1.msra.mxu0 0.0
        %1602 = vmatprep.subr.mxu0 0.0
        %1603 = vmatpush1.msra.mxu0 0.0
        %1604 = vmatprep.subr.mxu0 0.0
        %1605 = vmatpush1.msra.mxu0 0.0
        %1606 = vmatprep.subr.mxu0 0.0
        %1607 = vmatpush1.msra.mxu0 0.0
        %1608 = vmatprep.subr.mxu0 0.0
        %1609 = vmatpush1.msra.mxu0 0.0
        %1610 = vmatprep.subr.mxu0 0.0
        %1611 = vmatpush1.msra.mxu0 0.0
        %1612 = vmatprep.subr.mxu0 0.0
        %1613 = vmatpush1.msra.mxu0 0.0
        %1614 = vmatprep.mubr.f32.mxu0 0.0
        %1615 = vmatmul.mubr.f32.gmra.mrb[0].mxu0 %v1548
        %v1616 = vpop.f32.mrb[0].mxu0
        %v1617 = vadd.f32 0.0, %v1616
        %v1618 = vpop.f32.mrb[0].mxu0
        %1619 = vdwg.mxu0
        %v1620 = vadd.f32 %v1301, %v1617
        %v1621 = vmul.f32 %v1620, %v282
        %v1622 = vxor.u32 %v1621, 2147483648
        %v1623 = vmul.f32 %v1622, 1.442695
        %v1624 = vpow.pop %v1623
        %v1625 = vadd.f32 %v1624, 1.0
        %v1626 = vrcp.pop %v1625
        %v1627 = vmul.f32 1.0, %v1626
        %v1628 = vmul.f32 %v1627, %v282
        %v1629 = vadd.f32 %v1628, %v283
        %v1630 = vmul.f32 %v1629, %v1532
        %1632 = vrot.lane.b32.xlu0 %v1629, 64
        %v1633 = vpop.permute.xlu0 %1632
        %v1635 = vmul.f32 %v1629, %v1633
        %1637 = vrot.lane.b32.xlu0 %v1635, 32
        %v1638 = vpop.permute.xlu0 %1637
        %v1640 = vadd.f32 %v1630, %v1638
        %v1641 = vtanh.pop %v1640
        %1643 = vrot.lane.b32.xlu0 %v1641, 64
        %v1644 = vpop.permute.xlu0 %1643
        %v1646 = vmul.f32 %v1629, %v1644
        %v1647 = vlaneseq
        %v1648 = vshrl.u32 %v1647, 7
        %v1649 = vsub.s32 7, %v1648
        %v1650 = vrot.slane %v1646, %v1649
        %v1651 = vmul.f32 %v294, %v1650
        %v1652 = vadd.f32 %v1544, %v1651
        %1654 = vrot.lane.b32.xlu0 %v1646, 32
        %v1655 = vpop.permute.xlu0 %1654
        %v1656 = vsel %vm392, %v1655, 0
        %1658 = vmatprep.subr.mxu0 0.0
        %1659 = vmatpush1.msra.mxu0 %v1330
        %1660 = vmatprep.subr.mxu0 0.0
        %1661 = vmatpush1.msra.mxu0 %v1331
        %1662 = vmatprep.subr.mxu0 0.0
        %1663 = vmatpush1.msra.mxu0 %v1332
        %1664 = vmatprep.subr.mxu0 0.0
        %1665 = vmatpush1.msra.mxu0 %v1333
        %1666 = vmatprep.subr.mxu0 0.0
        %1667 = vmatpush1.msra.mxu0 0.0
        %1668 = vmatprep.subr.mxu0 0.0
        %1669 = vmatpush1.msra.mxu0 0.0
        %1670 = vmatprep.subr.mxu0 0.0
        %1671 = vmatpush1.msra.mxu0 0.0
        %1672 = vmatprep.subr.mxu0 0.0
        %1673 = vmatpush1.msra.mxu0 0.0
        %1674 = vmatprep.subr.mxu0 0.0
        %1675 = vmatpush1.msra.mxu0 0.0
        %1676 = vmatprep.subr.mxu0 0.0
        %1677 = vmatpush1.msra.mxu0 0.0
        %1678 = vmatprep.subr.mxu0 0.0
        %1679 = vmatpush1.msra.mxu0 0.0
        %1680 = vmatprep.subr.mxu0 0.0
        %1681 = vmatpush1.msra.mxu0 0.0
        %1682 = vmatprep.subr.mxu0 0.0
        %1683 = vmatpush1.msra.mxu0 0.0
        %1684 = vmatprep.subr.mxu0 0.0
        %1685 = vmatpush1.msra.mxu0 0.0
        %1686 = vmatprep.subr.mxu0 0.0
        %1687 = vmatpush1.msra.mxu0 0.0
        %1688 = vmatprep.subr.mxu0 0.0
        %1689 = vmatpush1.msra.mxu0 0.0
        %1690 = vmatprep.subr.mxu0 0.0
        %1691 = vmatpush1.msra.mxu0 0.0
        %1692 = vmatprep.subr.mxu0 0.0
        %1693 = vmatpush1.msra.mxu0 0.0
        %1694 = vmatprep.subr.mxu0 0.0
        %1695 = vmatpush1.msra.mxu0 0.0
        %1696 = vmatprep.subr.mxu0 0.0
        %1697 = vmatpush1.msra.mxu0 0.0
        %1698 = vmatprep.subr.mxu0 0.0
        %1699 = vmatpush1.msra.mxu0 0.0
        %1700 = vmatprep.subr.mxu0 0.0
        %1701 = vmatpush1.msra.mxu0 0.0
        %1702 = vmatprep.subr.mxu0 0.0
        %1703 = vmatpush1.msra.mxu0 0.0
        %1704 = vmatprep.subr.mxu0 0.0
        %1705 = vmatpush1.msra.mxu0 0.0
        %1706 = vmatprep.subr.mxu0 0.0
        %1707 = vmatpush1.msra.mxu0 0.0
        %1708 = vmatprep.subr.mxu0 0.0
        %1709 = vmatpush1.msra.mxu0 0.0
        %1710 = vmatprep.subr.mxu0 0.0
        %1711 = vmatpush1.msra.mxu0 0.0
        %1712 = vmatprep.subr.mxu0 0.0
        %1713 = vmatpush1.msra.mxu0 0.0
        %1714 = vmatprep.subr.mxu0 0.0
        %1715 = vmatpush1.msra.mxu0 0.0
        %1716 = vmatprep.subr.mxu0 0.0
        %1717 = vmatpush1.msra.mxu0 0.0
        %1718 = vmatprep.subr.mxu0 0.0
        %1719 = vmatpush1.msra.mxu0 0.0
        %1720 = vmatprep.subr.mxu0 0.0
        %1721 = vmatpush1.msra.mxu0 0.0
        %1722 = vmatprep.mubr.f32.mxu0 0.0
        %1723 = vmatmul.mubr.f32.gmra.mrb[0].mxu0 %v1656
        %v1724 = vpop.f32.mrb[0].mxu0
        %v1725 = vadd.f32 0.0, %v1724
        %v1726 = vpop.f32.mrb[0].mxu0
        %1727 = vdwg.mxu0
        %v1728 = vadd.f32 %v1306, %v1725
        %v1729 = vmul.f32 %v1728, %v282
        %v1730 = vxor.u32 %v1729, 2147483648
        %v1731 = vmul.f32 %v1730, 1.442695
        %v1732 = vpow.pop %v1731
        %v1733 = vadd.f32 %v1732, 1.0
        %v1734 = vrcp.pop %v1733
        %v1735 = vmul.f32 1.0, %v1734
        %v1736 = vmul.f32 %v1735, %v282
        %v1737 = vadd.f32 %v1736, %v283
        %v1738 = vmul.f32 %v1737, %v1640
        %1740 = vrot.lane.b32.xlu0 %v1737, 64
        %v1741 = vpop.permute.xlu0 %1740
        %v1743 = vmul.f32 %v1737, %v1741
        %1745 = vrot.lane.b32.xlu0 %v1743, 32
        %v1746 = vpop.permute.xlu0 %1745
        %v1748 = vadd.f32 %v1738, %v1746
        %v1749 = vtanh.pop %v1748
        %1751 = vrot.lane.b32.xlu0 %v1749, 64
        %v1752 = vpop.permute.xlu0 %1751
        %v1754 = vmul.f32 %v1737, %v1752
        %v1755 = vlaneseq
        %v1756 = vshrl.u32 %v1755, 7
        %v1757 = vsub.s32 7, %v1756
        %v1758 = vrot.slane %v1754, %v1757
        %v1759 = vmul.f32 %v297, %v1758
        %v1760 = vadd.f32 %v1652, %v1759
        %1762 = vrot.lane.b32.xlu0 %v1754, 32
        %v1763 = vpop.permute.xlu0 %1762
        %v1764 = vsel %vm392, %v1763, 0
        %1766 = vmatprep.subr.mxu0 0.0
        %1767 = vmatpush1.msra.mxu0 %v1330
        %1768 = vmatprep.subr.mxu0 0.0
        %1769 = vmatpush1.msra.mxu0 %v1331
        %1770 = vmatprep.subr.mxu0 0.0
        %1771 = vmatpush1.msra.mxu0 %v1332
        %1772 = vmatprep.subr.mxu0 0.0
        %1773 = vmatpush1.msra.mxu0 %v1333
        %1774 = vmatprep.subr.mxu0 0.0
        %1775 = vmatpush1.msra.mxu0 0.0
        %1776 = vmatprep.subr.mxu0 0.0
        %1777 = vmatpush1.msra.mxu0 0.0
        %1778 = vmatprep.subr.mxu0 0.0
        %1779 = vmatpush1.msra.mxu0 0.0
        %1780 = vmatprep.subr.mxu0 0.0
        %1781 = vmatpush1.msra.mxu0 0.0
        %1782 = vmatprep.subr.mxu0 0.0
        %1783 = vmatpush1.msra.mxu0 0.0
        %1784 = vmatprep.subr.mxu0 0.0
        %1785 = vmatpush1.msra.mxu0 0.0
        %1786 = vmatprep.subr.mxu0 0.0
        %1787 = vmatpush1.msra.mxu0 0.0
        %1788 = vmatprep.subr.mxu0 0.0
        %1789 = vmatpush1.msra.mxu0 0.0
        %1790 = vmatprep.subr.mxu0 0.0
        %1791 = vmatpush1.msra.mxu0 0.0
        %1792 = vmatprep.subr.mxu0 0.0
        %1793 = vmatpush1.msra.mxu0 0.0
        %1794 = vmatprep.subr.mxu0 0.0
        %1795 = vmatpush1.msra.mxu0 0.0
        %1796 = vmatprep.subr.mxu0 0.0
        %1797 = vmatpush1.msra.mxu0 0.0
        %1798 = vmatprep.subr.mxu0 0.0
        %1799 = vmatpush1.msra.mxu0 0.0
        %1800 = vmatprep.subr.mxu0 0.0
        %1801 = vmatpush1.msra.mxu0 0.0
        %1802 = vmatprep.subr.mxu0 0.0
        %1803 = vmatpush1.msra.mxu0 0.0
        %1804 = vmatprep.subr.mxu0 0.0
        %1805 = vmatpush1.msra.mxu0 0.0
        %1806 = vmatprep.subr.mxu0 0.0
        %1807 = vmatpush1.msra.mxu0 0.0
        %1808 = vmatprep.subr.mxu0 0.0
        %1809 = vmatpush1.msra.mxu0 0.0
        %1810 = vmatprep.subr.mxu0 0.0
        %1811 = vmatpush1.msra.mxu0 0.0
        %1812 = vmatprep.subr.mxu0 0.0
        %1813 = vmatpush1.msra.mxu0 0.0
        %1814 = vmatprep.subr.mxu0 0.0
        %1815 = vmatpush1.msra.mxu0 0.0
        %1816 = vmatprep.subr.mxu0 0.0
        %1817 = vmatpush1.msra.mxu0 0.0
        %1818 = vmatprep.subr.mxu0 0.0
        %1819 = vmatpush1.msra.mxu0 0.0
        %1820 = vmatprep.subr.mxu0 0.0
        %1821 = vmatpush1.msra.mxu0 0.0
        %1822 = vmatprep.subr.mxu0 0.0
        %1823 = vmatpush1.msra.mxu0 0.0
        %1824 = vmatprep.subr.mxu0 0.0
        %1825 = vmatpush1.msra.mxu0 0.0
        %1826 = vmatprep.subr.mxu0 0.0
        %1827 = vmatpush1.msra.mxu0 0.0
        %1828 = vmatprep.subr.mxu0 0.0
        %1829 = vmatpush1.msra.mxu0 0.0
        %1830 = vmatprep.mubr.f32.mxu0 0.0
        %1831 = vmatmul.mubr.f32.gmra.mrb[0].mxu0 %v1764
        %v1832 = vpop.f32.mrb[0].mxu0
        %v1833 = vadd.f32 0.0, %v1832
        %v1834 = vpop.f32.mrb[0].mxu0
        %1835 = vdwg.mxu0
        %v1836 = vadd.f32 %v1311, %v1833
        %v1837 = vmul.f32 %v1836, %v282
        %v1838 = vxor.u32 %v1837, 2147483648
        %v1839 = vmul.f32 %v1838, 1.442695
        %v1840 = vpow.pop %v1839
        %v1841 = vadd.f32 %v1840, 1.0
        %v1842 = vrcp.pop %v1841
        %v1843 = vmul.f32 1.0, %v1842
        %v1844 = vmul.f32 %v1843, %v282
        %v1845 = vadd.f32 %v1844, %v283
        %v1846 = vmul.f32 %v1845, %v1748
        %1848 = vrot.lane.b32.xlu0 %v1845, 64
        %v1849 = vpop.permute.xlu0 %1848
        %v1851 = vmul.f32 %v1845, %v1849
        %1853 = vrot.lane.b32.xlu0 %v1851, 32
        %v1854 = vpop.permute.xlu0 %1853
        %v1856 = vadd.f32 %v1846, %v1854
        %v1857 = vtanh.pop %v1856
        %1859 = vrot.lane.b32.xlu0 %v1857, 64
        %v1860 = vpop.permute.xlu0 %1859
        %v1862 = vmul.f32 %v1845, %v1860
        %v1863 = vlaneseq
        %v1864 = vshrl.u32 %v1863, 7
        %v1865 = vsub.s32 7, %v1864
        %v1866 = vrot.slane %v1862, %v1865
        %v1867 = vmul.f32 %v300, %v1866
        %v1868 = vadd.f32 %v1760, %v1867
        %1870 = vrot.lane.b32.xlu0 %v1862, 32
        %v1871 = vpop.permute.xlu0 %1870
        %v1872 = vsel %vm392, %v1871, 0
        %1874 = vmatprep.subr.mxu0 0.0
        %1875 = vmatpush1.msra.mxu0 %v1330
        %1876 = vmatprep.subr.mxu0 0.0
        %1877 = vmatpush1.msra.mxu0 %v1331
        %1878 = vmatprep.subr.mxu0 0.0
        %1879 = vmatpush1.msra.mxu0 %v1332
        %1880 = vmatprep.subr.mxu0 0.0
        %1881 = vmatpush1.msra.mxu0 %v1333
        %1882 = vmatprep.subr.mxu0 0.0
        %1883 = vmatpush1.msra.mxu0 0.0
        %1884 = vmatprep.subr.mxu0 0.0
        %1885 = vmatpush1.msra.mxu0 0.0
        %1886 = vmatprep.subr.mxu0 0.0
        %1887 = vmatpush1.msra.mxu0 0.0
        %1888 = vmatprep.subr.mxu0 0.0
        %1889 = vmatpush1.msra.mxu0 0.0
        %1890 = vmatprep.subr.mxu0 0.0
        %1891 = vmatpush1.msra.mxu0 0.0
        %1892 = vmatprep.subr.mxu0 0.0
        %1893 = vmatpush1.msra.mxu0 0.0
        %1894 = vmatprep.subr.mxu0 0.0
        %1895 = vmatpush1.msra.mxu0 0.0
        %1896 = vmatprep.subr.mxu0 0.0
        %1897 = vmatpush1.msra.mxu0 0.0
        %1898 = vmatprep.subr.mxu0 0.0
        %1899 = vmatpush1.msra.mxu0 0.0
        %1900 = vmatprep.subr.mxu0 0.0
        %1901 = vmatpush1.msra.mxu0 0.0
        %1902 = vmatprep.subr.mxu0 0.0
        %1903 = vmatpush1.msra.mxu0 0.0
        %1904 = vmatprep.subr.mxu0 0.0
        %1905 = vmatpush1.msra.mxu0 0.0
        %1906 = vmatprep.subr.mxu0 0.0
        %1907 = vmatpush1.msra.mxu0 0.0
        %1908 = vmatprep.subr.mxu0 0.0
        %1909 = vmatpush1.msra.mxu0 0.0
        %1910 = vmatprep.subr.mxu0 0.0
        %1911 = vmatpush1.msra.mxu0 0.0
        %1912 = vmatprep.subr.mxu0 0.0
        %1913 = vmatpush1.msra.mxu0 0.0
        %1914 = vmatprep.subr.mxu0 0.0
        %1915 = vmatpush1.msra.mxu0 0.0
        %1916 = vmatprep.subr.mxu0 0.0
        %1917 = vmatpush1.msra.mxu0 0.0
        %1918 = vmatprep.subr.mxu0 0.0
        %1919 = vmatpush1.msra.mxu0 0.0
        %1920 = vmatprep.subr.mxu0 0.0
        %1921 = vmatpush1.msra.mxu0 0.0
        %1922 = vmatprep.subr.mxu0 0.0
        %1923 = vmatpush1.msra.mxu0 0.0
        %1924 = vmatprep.subr.mxu0 0.0
        %1925 = vmatpush1.msra.mxu0 0.0
        %1926 = vmatprep.subr.mxu0 0.0
        %1927 = vmatpush1.msra.mxu0 0.0
        %1928 = vmatprep.subr.mxu0 0.0
        %1929 = vmatpush1.msra.mxu0 0.0
        %1930 = vmatprep.subr.mxu0 0.0
        %1931 = vmatpush1.msra.mxu0 0.0
        %1932 = vmatprep.subr.mxu0 0.0
        %1933 = vmatpush1.msra.mxu0 0.0
        %1934 = vmatprep.subr.mxu0 0.0
        %1935 = vmatpush1.msra.mxu0 0.0
        %1936 = vmatprep.subr.mxu0 0.0
        %1937 = vmatpush1.msra.mxu0 0.0
        %1938 = vmatprep.mubr.f32.mxu0 0.0
        %1939 = vmatmul.mubr.f32.gmra.mrb[0].mxu0 %v1872
        %v1940 = vpop.f32.mrb[0].mxu0
        %v1941 = vadd.f32 0.0, %v1940
        %v1942 = vpop.f32.mrb[0].mxu0
        %1943 = vdwg.mxu0
        %v1944 = vadd.f32 %v1316, %v1941
        %v1945 = vmul.f32 %v1944, %v282
        %v1946 = vxor.u32 %v1945, 2147483648
        %v1947 = vmul.f32 %v1946, 1.442695
        %v1948 = vpow.pop %v1947
        %v1949 = vadd.f32 %v1948, 1.0
        %v1950 = vrcp.pop %v1949
        %v1951 = vmul.f32 1.0, %v1950
        %v1952 = vmul.f32 %v1951, %v282
        %v1953 = vadd.f32 %v1952, %v283
        %v1954 = vmul.f32 %v1953, %v1856
        %1956 = vrot.lane.b32.xlu0 %v1953, 64
        %v1957 = vpop.permute.xlu0 %1956
        %v1959 = vmul.f32 %v1953, %v1957
        %1961 = vrot.lane.b32.xlu0 %v1959, 32
        %v1962 = vpop.permute.xlu0 %1961
        %v1964 = vadd.f32 %v1954, %v1962
        %v1965 = vtanh.pop %v1964
        %1967 = vrot.lane.b32.xlu0 %v1965, 64
        %v1968 = vpop.permute.xlu0 %1967
        %v1970 = vmul.f32 %v1953, %v1968
        %v1971 = vlaneseq
        %v1972 = vshrl.u32 %v1971, 7
        %v1973 = vsub.s32 7, %v1972
        %v1974 = vrot.slane %v1970, %v1973
        %v1975 = vmul.f32 %v303, %v1974
        %v1976 = vadd.f32 %v1868, %v1975
        %1978 = vrot.lane.b32.xlu0 %v1970, 32
        %v1979 = vpop.permute.xlu0 %1978
        %v1980 = vsel %vm392, %v1979, 0
        %1982 = vmatprep.subr.mxu0 0.0
        %1983 = vmatpush1.msra.mxu0 %v1330
        %1984 = vmatprep.subr.mxu0 0.0
        %1985 = vmatpush1.msra.mxu0 %v1331
        %1986 = vmatprep.subr.mxu0 0.0
        %1987 = vmatpush1.msra.mxu0 %v1332
        %1988 = vmatprep.subr.mxu0 0.0
        %1989 = vmatpush1.msra.mxu0 %v1333
        %1990 = vmatprep.subr.mxu0 0.0
        %1991 = vmatpush1.msra.mxu0 0.0
        %1992 = vmatprep.subr.mxu0 0.0
        %1993 = vmatpush1.msra.mxu0 0.0
        %1994 = vmatprep.subr.mxu0 0.0
        %1995 = vmatpush1.msra.mxu0 0.0
        %1996 = vmatprep.subr.mxu0 0.0
        %1997 = vmatpush1.msra.mxu0 0.0
        %1998 = vmatprep.subr.mxu0 0.0
        %1999 = vmatpush1.msra.mxu0 0.0
        %2000 = vmatprep.subr.mxu0 0.0
        %2001 = vmatpush1.msra.mxu0 0.0
        %2002 = vmatprep.subr.mxu0 0.0
        %2003 = vmatpush1.msra.mxu0 0.0
        %2004 = vmatprep.subr.mxu0 0.0
        %2005 = vmatpush1.msra.mxu0 0.0
        %2006 = vmatprep.subr.mxu0 0.0
        %2007 = vmatpush1.msra.mxu0 0.0
        %2008 = vmatprep.subr.mxu0 0.0
        %2009 = vmatpush1.msra.mxu0 0.0
        %2010 = vmatprep.subr.mxu0 0.0
        %2011 = vmatpush1.msra.mxu0 0.0
        %2012 = vmatprep.subr.mxu0 0.0
        %2013 = vmatpush1.msra.mxu0 0.0
        %2014 = vmatprep.subr.mxu0 0.0
        %2015 = vmatpush1.msra.mxu0 0.0
        %2016 = vmatprep.subr.mxu0 0.0
        %2017 = vmatpush1.msra.mxu0 0.0
        %2018 = vmatprep.subr.mxu0 0.0
        %2019 = vmatpush1.msra.mxu0 0.0
        %2020 = vmatprep.subr.mxu0 0.0
        %2021 = vmatpush1.msra.mxu0 0.0
        %2022 = vmatprep.subr.mxu0 0.0
        %2023 = vmatpush1.msra.mxu0 0.0
        %2024 = vmatprep.subr.mxu0 0.0
        %2025 = vmatpush1.msra.mxu0 0.0
        %2026 = vmatprep.subr.mxu0 0.0
        %2027 = vmatpush1.msra.mxu0 0.0
        %2028 = vmatprep.subr.mxu0 0.0
        %2029 = vmatpush1.msra.mxu0 0.0
        %2030 = vmatprep.subr.mxu0 0.0
        %2031 = vmatpush1.msra.mxu0 0.0
        %2032 = vmatprep.subr.mxu0 0.0
        %2033 = vmatpush1.msra.mxu0 0.0
        %2034 = vmatprep.subr.mxu0 0.0
        %2035 = vmatpush1.msra.mxu0 0.0
        %2036 = vmatprep.subr.mxu0 0.0
        %2037 = vmatpush1.msra.mxu0 0.0
        %2038 = vmatprep.subr.mxu0 0.0
        %2039 = vmatpush1.msra.mxu0 0.0
        %2040 = vmatprep.subr.mxu0 0.0
        %2041 = vmatpush1.msra.mxu0 0.0
        %2042 = vmatprep.subr.mxu0 0.0
        %2043 = vmatpush1.msra.mxu0 0.0
        %2044 = vmatprep.subr.mxu0 0.0
        %2045 = vmatpush1.msra.mxu0 0.0
        %2046 = vmatprep.mubr.f32.mxu0 0.0
        %2047 = vmatmul.mubr.f32.gmra.mrb[0].mxu0 %v1980
        %v2048 = vpop.f32.mrb[0].mxu0
        %v2049 = vadd.f32 0.0, %v2048
        %v2050 = vpop.f32.mrb[0].mxu0
        %2051 = vdwg.mxu0
        %v2052 = vadd.f32 %v1321, %v2049
        %v2053 = vmul.f32 %v2052, %v282
        %v2054 = vxor.u32 %v2053, 2147483648
        %v2055 = vmul.f32 %v2054, 1.442695
        %v2056 = vpow.pop %v2055
        %v2057 = vadd.f32 %v2056, 1.0
        %v2058 = vrcp.pop %v2057
        %v2059 = vmul.f32 1.0, %v2058
        %v2060 = vmul.f32 %v2059, %v282
        %v2061 = vadd.f32 %v2060, %v283
        %v2062 = vmul.f32 %v2061, %v1964
        %2064 = vrot.lane.b32.xlu0 %v2061, 64
        %v2065 = vpop.permute.xlu0 %2064
        %v2067 = vmul.f32 %v2061, %v2065
        %2069 = vrot.lane.b32.xlu0 %v2067, 32
        %v2070 = vpop.permute.xlu0 %2069
        %v2072 = vadd.f32 %v2062, %v2070
        %v2073 = vtanh.pop %v2072
        %2075 = vrot.lane.b32.xlu0 %v2073, 64
        %v2076 = vpop.permute.xlu0 %2075
        %v2078 = vmul.f32 %v2061, %v2076
        %v2079 = vlaneseq
        %v2080 = vshrl.u32 %v2079, 7
        %v2081 = vsub.s32 7, %v2080
        %v2082 = vrot.slane %v2078, %v2081
        %v2083 = vmul.f32 %v306, %v2082
        %v2084 = vadd.f32 %v1976, %v2083
        %2086 = vrot.lane.b32.xlu0 %v2078, 32
        %v2087 = vpop.permute.xlu0 %2086
        %v2088 = vsel %vm392, %v2087, 0
        %2090 = vmatprep.subr.mxu0 0.0
        %2091 = vmatpush1.msra.mxu0 %v1330
        %2092 = vmatprep.subr.mxu0 0.0
        %2093 = vmatpush1.msra.mxu0 %v1331
        %2094 = vmatprep.subr.mxu0 0.0
        %2095 = vmatpush1.msra.mxu0 %v1332
        %2096 = vmatprep.subr.mxu0 0.0
        %2097 = vmatpush1.msra.mxu0 %v1333
        %2098 = vmatprep.subr.mxu0 0.0
        %2099 = vmatpush1.msra.mxu0 0.0
        %2100 = vmatprep.subr.mxu0 0.0
        %2101 = vmatpush1.msra.mxu0 0.0
        %2102 = vmatprep.subr.mxu0 0.0
        %2103 = vmatpush1.msra.mxu0 0.0
        %2104 = vmatprep.subr.mxu0 0.0
        %2105 = vmatpush1.msra.mxu0 0.0
        %2106 = vmatprep.subr.mxu0 0.0
        %2107 = vmatpush1.msra.mxu0 0.0
        %2108 = vmatprep.subr.mxu0 0.0
        %2109 = vmatpush1.msra.mxu0 0.0
        %2110 = vmatprep.subr.mxu0 0.0
        %2111 = vmatpush1.msra.mxu0 0.0
        %2112 = vmatprep.subr.mxu0 0.0
        %2113 = vmatpush1.msra.mxu0 0.0
        %2114 = vmatprep.subr.mxu0 0.0
        %2115 = vmatpush1.msra.mxu0 0.0
        %2116 = vmatprep.subr.mxu0 0.0
        %2117 = vmatpush1.msra.mxu0 0.0
        %2118 = vmatprep.subr.mxu0 0.0
        %2119 = vmatpush1.msra.mxu0 0.0
        %2120 = vmatprep.subr.mxu0 0.0
        %2121 = vmatpush1.msra.mxu0 0.0
        %2122 = vmatprep.subr.mxu0 0.0
        %2123 = vmatpush1.msra.mxu0 0.0
        %2124 = vmatprep.subr.mxu0 0.0
        %2125 = vmatpush1.msra.mxu0 0.0
        %2126 = vmatprep.subr.mxu0 0.0
        %2127 = vmatpush1.msra.mxu0 0.0
        %2128 = vmatprep.subr.mxu0 0.0
        %2129 = vmatpush1.msra.mxu0 0.0
        %2130 = vmatprep.subr.mxu0 0.0
        %2131 = vmatpush1.msra.mxu0 0.0
        %2132 = vmatprep.subr.mxu0 0.0
        %2133 = vmatpush1.msra.mxu0 0.0
        %2134 = vmatprep.subr.mxu0 0.0
        %2135 = vmatpush1.msra.mxu0 0.0
        %2136 = vmatprep.subr.mxu0 0.0
        %2137 = vmatpush1.msra.mxu0 0.0
        %2138 = vmatprep.subr.mxu0 0.0
        %2139 = vmatpush1.msra.mxu0 0.0
        %2140 = vmatprep.subr.mxu0 0.0
        %2141 = vmatpush1.msra.mxu0 0.0
        %2142 = vmatprep.subr.mxu0 0.0
        %2143 = vmatpush1.msra.mxu0 0.0
        %2144 = vmatprep.subr.mxu0 0.0
        %2145 = vmatpush1.msra.mxu0 0.0
        %2146 = vmatprep.subr.mxu0 0.0
        %2147 = vmatpush1.msra.mxu0 0.0
        %2148 = vmatprep.subr.mxu0 0.0
        %2149 = vmatpush1.msra.mxu0 0.0
        %2150 = vmatprep.subr.mxu0 0.0
        %2151 = vmatpush1.msra.mxu0 0.0
        %2152 = vmatprep.subr.mxu0 0.0
        %2153 = vmatpush1.msra.mxu0 0.0
        %2154 = vmatprep.mubr.f32.mxu0 0.0
        %2155 = vmatmul.mubr.f32.gmra.mrb[0].mxu0 %v2088
        %v2156 = vpop.f32.mrb[0].mxu0
        %v2157 = vadd.f32 0.0, %v2156
        %v2158 = vpop.f32.mrb[0].mxu0
        %2159 = vdwg.mxu0
        %v2160 = vadd.f32 %v1326, %v2157
        %v2161 = vmul.f32 %v2160, %v282
        %v2162 = vxor.u32 %v2161, 2147483648
        %v2163 = vmul.f32 %v2162, 1.442695
        %v2164 = vpow.pop %v2163
        %v2165 = vadd.f32 %v2164, 1.0
        %v2166 = vrcp.pop %v2165
        %v2167 = vmul.f32 1.0, %v2166
        %v2168 = vmul.f32 %v2167, %v282
        %v2169 = vadd.f32 %v2168, %v283
        %v2170 = vmul.f32 %v2169, %v2072
        %2172 = vrot.lane.b32.xlu0 %v2169, 64
        %v2173 = vpop.permute.xlu0 %2172
        %v2175 = vmul.f32 %v2169, %v2173
        %2177 = vrot.lane.b32.xlu0 %v2175, 32
        %v2178 = vpop.permute.xlu0 %2177
        %v2180 = vadd.f32 %v2170, %v2178
        %v2181 = vtanh.pop %v2180
        %2183 = vrot.lane.b32.xlu0 %v2181, 64
        %v2184 = vpop.permute.xlu0 %2183
        %v2186 = vmul.f32 %v2169, %v2184
        %v2187 = vlaneseq
        %v2188 = vshrl.u32 %v2187, 7
        %v2189 = vsub.s32 7, %v2188
        %v2190 = vrot.slane %v2186, %v2189
        %v2191 = vmul.f32 %v309, %v2190
        %v2192 = vadd.f32 %v2084, %v2191
        %v2193 = vld [vmem:[%s5] sm:$0xff]
        %v2194 = vld [vmem:[%s5 + $0x8] sm:$0xff]
        %v2195 = vld [vmem:[%s5 + $0x10] sm:$0xff]
        %v2196 = vld [vmem:[%s5 + $0x18] sm:$0xff]
        %v2197 = vld [vmem:[%s6] sm:$0x1]
        %v2199 = vlaneseq
        %v2200 = vshrl.u32 %v2199, 7
        %v2201 = vsub.s32 0, %v2200
        %v2202 = vrot.slane %v2197, %v2201
        %2205 = vrot.lane.b32.xlu0 %v2192, 32
        %v2206 = vpop.permute.xlu0 %2205
        %v2207 = vsel %vm392, %v2206, 0
        %2209 = vmatprep.subr.mxu0 0.0
        %2210 = vmatpush1.msra.mxu0 %v2193
        %2211 = vmatprep.subr.mxu0 0.0
        %2212 = vmatpush1.msra.mxu0 %v2194
        %2213 = vmatprep.subr.mxu0 0.0
        %2214 = vmatpush1.msra.mxu0 %v2195
        %2215 = vmatprep.subr.mxu0 0.0
        %2216 = vmatpush1.msra.mxu0 %v2196
        %2217 = vmatprep.subr.mxu0 0.0
        %2218 = vmatpush1.msra.mxu0 0.0
        %2219 = vmatprep.subr.mxu0 0.0
        %2220 = vmatpush1.msra.mxu0 0.0
        %2221 = vmatprep.subr.mxu0 0.0
        %2222 = vmatpush1.msra.mxu0 0.0
        %2223 = vmatprep.subr.mxu0 0.0
        %2224 = vmatpush1.msra.mxu0 0.0
        %2225 = vmatprep.subr.mxu0 0.0
        %2226 = vmatpush1.msra.mxu0 0.0
        %2227 = vmatprep.subr.mxu0 0.0
        %2228 = vmatpush1.msra.mxu0 0.0
        %2229 = vmatprep.subr.mxu0 0.0
        %2230 = vmatpush1.msra.mxu0 0.0
        %2231 = vmatprep.subr.mxu0 0.0
        %2232 = vmatpush1.msra.mxu0 0.0
        %2233 = vmatprep.subr.mxu0 0.0
        %2234 = vmatpush1.msra.mxu0 0.0
        %2235 = vmatprep.subr.mxu0 0.0
        %2236 = vmatpush1.msra.mxu0 0.0
        %2237 = vmatprep.subr.mxu0 0.0
        %2238 = vmatpush1.msra.mxu0 0.0
        %2239 = vmatprep.subr.mxu0 0.0
        %2240 = vmatpush1.msra.mxu0 0.0
        %2241 = vmatprep.subr.mxu0 0.0
        %2242 = vmatpush1.msra.mxu0 0.0
        %2243 = vmatprep.subr.mxu0 0.0
        %2244 = vmatpush1.msra.mxu0 0.0
        %2245 = vmatprep.subr.mxu0 0.0
        %2246 = vmatpush1.msra.mxu0 0.0
        %2247 = vmatprep.subr.mxu0 0.0
        %2248 = vmatpush1.msra.mxu0 0.0
        %2249 = vmatprep.subr.mxu0 0.0
        %2250 = vmatpush1.msra.mxu0 0.0
        %2251 = vmatprep.subr.mxu0 0.0
        %2252 = vmatpush1.msra.mxu0 0.0
        %2253 = vmatprep.subr.mxu0 0.0
        %2254 = vmatpush1.msra.mxu0 0.0
        %2255 = vmatprep.subr.mxu0 0.0
        %2256 = vmatpush1.msra.mxu0 0.0
        %2257 = vmatprep.subr.mxu0 0.0
        %2258 = vmatpush1.msra.mxu0 0.0
        %2259 = vmatprep.subr.mxu0 0.0
        %2260 = vmatpush1.msra.mxu0 0.0
        %2261 = vmatprep.subr.mxu0 0.0
        %2262 = vmatpush1.msra.mxu0 0.0
        %2263 = vmatprep.subr.mxu0 0.0
        %2264 = vmatpush1.msra.mxu0 0.0
        %2265 = vmatprep.subr.mxu0 0.0
        %2266 = vmatpush1.msra.mxu0 0.0
        %2267 = vmatprep.subr.mxu0 0.0
        %2268 = vmatpush1.msra.mxu0 0.0
        %2269 = vmatprep.subr.mxu0 0.0
        %2270 = vmatpush1.msra.mxu0 0.0
        %2271 = vmatprep.subr.mxu0 0.0
        %2272 = vmatpush1.msra.mxu0 0.0
        %2273 = vmatprep.mubr.f32.mxu0 0.0
        %2274 = vmatmul.mubr.f32.gmra.mrb[0].mxu0 %v2207
        %v2275 = vpop.f32.mrb[0].mxu0
        %v2276 = vadd.f32 %v2202, %v2275
        %v2277 = vpop.f32.mrb[0].mxu0
        %2278 = vdwg.mxu0
        %2279 = vst [vmem:[%s271] sm:$0xff] %v2276
        %s2280 = sand.u32 %s181, 1
        %s2281 = scalar_lea.sflag [#allocation3], %s2280
        %s2282 = sand.u32 %s181, 1
        %s2283 = smul.addr %s2282, 8
        %s2284 = scalar_lea.vmem [#allocation2], %s2283
        // Predicated region
        $region49: #{tpu_custom_call.1} parent=47 // pred_check
          %p2285 = pneg %p191
        $region50: #{tpu_custom_call.1} parent=47 // pred_check_branch
          %2287 = sbr.rel (%p2285) target = $region52
        $region51: #{tpu_custom_call.1} parent=47 // pred_region
          %s2289 = ssub.s32 128, 128
          %2290 = vsyncadd %s2281, %s2289
          %s2291 = smul.addr %s21, 128
          %s2292 = scalar_lea.hbm %s7, %s2291
          %s2294 = sshll.u32 %s2284, 4
          %s2295 = int_to_ptr.vmem [resolvable:$true] %s2294
          %2297 = dma.vmem_to_hbm [thread:$0]  %s2295, 128, %s2292, %s2281
        $region52: #{tpu_custom_call.1} parent=47 // pred_fallthru
          _
      $region48: #{tpu_custom_call.1} parent=5 // pred_fallthru
        _
      %p2298 = scmp.le.s32.totalorder 2, %s16
      // Predicated region
      $region53: #{tpu_custom_call.1} parent=5 // pred_check
        %p2299 = pneg %p2298
      $region54: #{tpu_custom_call.1} parent=5 // pred_check_branch
        %2301 = sbr.rel (%p2299) target = $region56
      $region55: #{tpu_custom_call.1} parent=5 // pred_region
        %s2302 = ssub.s32 %s16, 2
        // Predicated region
        $region57: #{tpu_custom_call.1} parent=55 // pred_check
          %p2303 = pneg %p197
        $region58: #{tpu_custom_call.1} parent=55 // pred_check_branch
          %2305 = sbr.rel (%p2303) target = $region60
        $region59: #{tpu_custom_call.1} parent=55 // pred_region
          %s2306 = sand.u32 %s182, 1
          %s2307 = scalar_lea.sflag [#allocation3], %s2306
          %s2308 = sand.u32 %s182, 1
          %s2309 = smul.addr %s2308, 8
          %s2310 = scalar_lea.vmem [#allocation2], %s2309
          %2311 = dma.done %s2307, 128
        $region60: #{tpu_custom_call.1} parent=55 // pred_fallthru
          _
      $region56: #{tpu_custom_call.1} parent=5 // pred_fallthru
        _
    $region6: #{tpu_custom_call.1} parent=1 // loop_footer
      %s20 = sadd.s32 1, %s16
    $region7: #{tpu_custom_call.1} parent=1 // loop_footer_branch
      %15 = sbr.rel target = $region3
    $region8: #{tpu_custom_call.1} parent=1 // loop_exit
      _
    %2312 = vsyncpa [#allocation3], 1
    %s2313 = scalar_lea.sflag [#allocation3], 1
    %2314 = vsyncpa %s2313, 1

</llo_original>
